<compile_context>
chip_gen: v6e
topology: v6e:2x2x1
jax: 0.10.0
libtpu: 0.0.40
codegen_flags: <defaults>
</compile_context>

<pallas_src>
import functools

import jax
import jax.numpy as jnp
from jax import lax
from jax.experimental import pallas as pl
from jax.experimental.pallas import tpu as pltpu  # noqa: F401

# ---------------- config (mirrors args) ----------------
BATCH = 2
D_MODEL = 32
NUM_CLASSES = 8
NUM_TYPES = 2
NODE_TYPE_SIZES = (5, 3)              # sums to NUM_CLASSES
FEATURE_ROOT = D_MODEL // 2           # 16
D2 = 2 * D_MODEL                      # 64  (label / decoder dim)
D4 = 4 * D_MODEL                      # 128 (classifier input dim)
T_MOTION = 16
T_AUDIO = 16
STATE_DIM = 8
CLASSIFIER_BIAS = True

NEG_INF = -1e30


def _floordiv_const(x, d):
    """i32 vector // positive Python-int constant (shift when power of two)."""
    if d & (d - 1) == 0:
        return lax.shift_right_logical(x, int(d).bit_length() - 1)
    return x // d


# ====================== fused Pallas kernel ======================

def _hmmbcr_kernel(motion_ref, audio_ref, state_ref, featwb_ref, wf_ref,
                   labels_ref, decw_ref, adj_ref, hgatw_ref, cls_ref,
                   out_ref, *, batch, t_motion, t_audio, num_classes):
    """feature_extraction -> fusion -> modal_to_label -> HGAT -> classifier."""
    f32 = jnp.float32
    bf16 = jnp.bfloat16
    fr = FEATURE_ROOT
    d2 = D2
    dm = D_MODEL

    # ---- stage 1: per-timestep feature extraction (tiny K; f32) ----
    w_m = featwb_ref[0:6, :]          # (6, FR)
    w_a = featwb_ref[6:7, :]          # (1, FR)
    w_s = featwb_ref[7:15, :]         # (STATE_DIM, FR)
    b_m = featwb_ref[15:16, :]
    b_a = featwb_ref[16:17, :]
    b_s = featwb_ref[17:18, :]

    motion_f = jnp.maximum(
        jnp.dot(motion_ref[...], w_m, preferred_element_type=f32) + b_m, 0.0)
    # Single-channel audio: outer product on the VPU instead of a K=1 matmul.
    audio_f = jnp.maximum(audio_ref[...] * w_a + b_a, 0.0)
    state_f = jnp.maximum(
        jnp.dot(state_ref[...], w_s, preferred_element_type=f32) + b_s, 0.0)

    # ---- stage 2: MULT-fusion projections; memory stays in VMEM ----
    wf_m = wf_ref[0:fr, :]
    wf_a = wf_ref[fr:2 * fr, :]
    wf_s = wf_ref[2 * fr:3 * fr, :]
    enc_m = jnp.maximum(jnp.dot(motion_f.astype(bf16), wf_m,
                                preferred_element_type=f32), 0.0)   # (B*T, D2)
    enc_a = jnp.maximum(jnp.dot(audio_f.astype(bf16), wf_a,
                                preferred_element_type=f32), 0.0)   # (B*Ta, D2)
    enc_s = jnp.maximum(jnp.dot(state_f.astype(bf16), wf_s,
                                preferred_element_type=f32), 0.0)   # (B, D2)
    mem = jnp.concatenate([enc_m, enc_a, enc_s], axis=0).astype(bf16)  # (M, D2)

    # ---- modal_to_label: label-query cross attention over fused memory ----
    # decw packs wq|wk|wv|wo lane-wise; 1/sqrt(D2) already folded into wq.
    qp = jnp.dot(labels_ref[...], decw_ref[:, 0:d2],
                 preferred_element_type=f32)                        # (C, D2)
    kv = jnp.dot(mem, decw_ref[:, d2:3 * d2],
                 preferred_element_type=f32)                        # (M, 2*D2)
    kp = kv[:, 0:d2].astype(bf16)
    vp = kv[:, d2:2 * d2].astype(bf16)

    # Scores computed once (queries are batch independent), then the small
    # (C, M) tile is replicated over batch rows.
    s_small = lax.dot_general(qp.astype(bf16), kp, (((1,), (1,)), ((), ())),
                              preferred_element_type=f32)           # (C, M)
    s = jnp.concatenate([s_small] * batch, axis=0)                  # (B*C, M)

    # In-kernel cross-batch mask: row r -> batch r // C; memory columns are
    # grouped [all motion | all audio | all state], each b-major.
    rows = batch * num_classes
    m_cols = batch * (t_motion + t_audio + 1)
    bt = batch * t_motion
    bta = bt + batch * t_audio
    row_ids = lax.broadcasted_iota(jnp.int32, (rows, m_cols), 0)
    col_ids = lax.broadcasted_iota(jnp.int32, (rows, m_cols), 1)
    row_b = _floordiv_const(row_ids, num_classes)
    col_b = jnp.where(col_ids < bt, _floordiv_const(col_ids, t_motion),
                      jnp.where(col_ids < bta,
                                _floordiv_const(col_ids - bt, t_audio),
                                col_ids - bta))
    s = jnp.where(row_b == col_b, s, NEG_INF)

    # Exact softmax (masked terms underflow to 0); approx reciprocal on EUP.
    s = s - jnp.max(s, axis=-1, keepdims=True)
    p = jnp.exp(s)
    p = p * pl.reciprocal(jnp.sum(p, axis=-1, keepdims=True), approx=True)

    attn = jnp.dot(p.astype(bf16), vp, preferred_element_type=f32)  # (B*C, D2)
    m2l = jnp.dot(attn.astype(bf16), decw_ref[:, 3 * d2:4 * d2],
                  preferred_element_type=f32)                       # (B*C, D2)

    # ---- label_to_label: 2-layer HGAT with block-diagonal adjacency ----
    w1 = hgatw_ref[0:d2, 0:dm]        # (D2, D_MODEL)
    w2 = hgatw_ref[d2:d2 + dm, :]     # (D_MODEL, D2)
    adj = adj_ref[...]                # (B*C, B*C)
    ax = jnp.dot(adj, m2l.astype(bf16), preferred_element_type=f32)
    h = jnp.maximum(jnp.dot(ax.astype(bf16), w1, preferred_element_type=f32),
                    0.0)
    ah = jnp.dot(adj, h.astype(bf16), preferred_element_type=f32)
    l2l = jnp.dot(ah.astype(bf16), w2, preferred_element_type=f32)  # (B*C, D2)

    # ---- classifier: Element_Wise_Layer + sigmoid (one 128-lane reduce) ----
    feat = jnp.concatenate([m2l, l2l], axis=-1)                     # (B*C, D4)
    w_cls = jnp.concatenate([cls_ref[:, 0:2 * d2]] * batch, axis=0)  # (B*C, D4)
    b_cls = jnp.concatenate([cls_ref[:, 2 * d2:2 * d2 + 1]] * batch, axis=0)
    logits = jnp.sum(feat * w_cls, axis=-1, keepdims=True) + b_cls  # (B*C, 1)
    out_ref[...] = jax.nn.sigmoid(logits)


# ====================== one-time operand packing ======================

def prepare_params(p):
    """Pack every data-independent operand ONCE (hoisted off the per-call path)."""
    f32 = jnp.float32
    bf16 = jnp.bfloat16

    featwb = jnp.concatenate(
        [p["w_motion"], p["w_audio"], p["w_state"],
         p["b_motion"][None, :], p["b_audio"][None, :], p["b_state"][None, :]],
        axis=0).astype(f32)                                          # (18, FR)
    wf = jnp.concatenate([p["wf_motion"], p["wf_audio"], p["wf_state"]],
                         axis=0).astype(bf16)                        # (48, D2)
    labels = jnp.concatenate(p["label_embedding"], axis=0).astype(bf16)  # (C, D2)

    scale = 1.0 / float(D2) ** 0.5
    decw = jnp.concatenate([p["dec_wq"] * scale, p["dec_wk"], p["dec_wv"],
                            p["dec_wo"]], axis=1).astype(bf16)       # (D2, 4*D2)

    adj_bd = jnp.kron(jnp.eye(BATCH, dtype=f32),
                      p["adjacency"].astype(f32)).astype(bf16)       # (B*C, B*C)

    hgat = jnp.zeros((D2 + D_MODEL, D2), f32)
    hgat = hgat.at[:D2, :D_MODEL].set(p["hgat_w1"])
    hgat = hgat.at[D2:, :].set(p["hgat_w2"])
    hgat = hgat.astype(bf16)                                         # (96, D2)

    cls_pack = jnp.concatenate([p["cls_w"], p["cls_b"]], axis=1).astype(f32)

    return {"featwb": featwb, "wf": wf, "labels": labels, "decw": decw,
            "adj_bd": adj_bd, "hgat": hgat, "cls_pack": cls_pack}


# ====================== forward ======================

def hmmbcr_forward(prepped, batch_acc, batch_gyro, batch_audio, batch_state):
    B, _, T = batch_acc.shape
    Ta = batch_audio.shape[2]

    # Only the data-dependent NCL -> row-major reshuffles stay outside the
    # kernel (they fuse into a couple of small copy fusions).
    motion_in = jnp.transpose(jnp.concatenate([batch_acc, batch_gyro], axis=1),
                              (0, 2, 1)).reshape(B * T, 6)           # (B*T, 6)
    audio_in = jnp.transpose(batch_audio, (0, 2, 1)).reshape(B * Ta, 1)
    state_in = batch_state                                           # (B, 8)

    kernel = functools.partial(_hmmbcr_kernel, batch=B, t_motion=T,
                               t_audio=Ta, num_classes=NUM_CLASSES)
    out = pl.pallas_call(
        kernel,
        out_shape=jax.ShapeDtypeStruct((B * NUM_CLASSES, 1), jnp.float32),
    )(motion_in, audio_in, state_in, prepped["featwb"], prepped["wf"],
      prepped["labels"], prepped["decw"], prepped["adj_bd"], prepped["hgat"],
      prepped["cls_pack"])
    return out.reshape(B, NUM_CLASSES)


# ====================== deterministic parameter init ======================

def init_params(key):
    ks = jax.random.split(key, 16)
    n = lambda k, s, scale=0.1: scale * jax.random.normal(k, s, jnp.float32)
    p = {
        "w_motion": n(ks[0], (6, FEATURE_ROOT)),
        "b_motion": jnp.zeros((FEATURE_ROOT,), jnp.float32),
        "w_audio": n(ks[1], (1, FEATURE_ROOT)),
        "b_audio": jnp.zeros((FEATURE_ROOT,), jnp.float32),
        "w_state": n(ks[2], (STATE_DIM, FEATURE_ROOT)),
        "b_state": jnp.zeros((FEATURE_ROOT,), jnp.float32),
        "wf_motion": n(ks[3], (FEATURE_ROOT, D2)),
        "wf_audio": n(ks[4], (FEATURE_ROOT, D2)),
        "wf_state": n(ks[5], (FEATURE_ROOT, D2)),
        "dec_wq": n(ks[6], (D2, D2)),
        "dec_wk": n(ks[7], (D2, D2)),
        "dec_wv": n(ks[8], (D2, D2)),
        "dec_wo": n(ks[9], (D2, D2)),
        "hgat_w1": n(ks[10], (D2, D_MODEL)),
        "hgat_w2": n(ks[11], (D_MODEL, D2)),
        "cls_w": n(ks[12], (NUM_CLASSES, D4)),
        "cls_b": (n(ks[13], (NUM_CLASSES, 1)) if CLASSIFIER_BIAS
                  else jnp.zeros((NUM_CLASSES, 1), jnp.float32)),
        "label_embedding": [
            n(ks[14], (NODE_TYPE_SIZES[0], D2)),
            n(ks[15], (NODE_TYPE_SIZES[1], D2)),
        ],
    }
    # deterministic adjacency: ring + self-loops, row-normalized.
    eye = jnp.eye(NUM_CLASSES, dtype=jnp.float32)
    ring = jnp.roll(eye, 1, axis=1) + jnp.roll(eye, -1, axis=1)
    adj = eye + ring
    p["adjacency"] = adj / jnp.sum(adj, axis=-1, keepdims=True)
    return p


if __name__ == "__main__":
    key = jax.random.PRNGKey(0)
    pkey, k_acc, k_gyro, k_audio, k_state = jax.random.split(key, 5)
    params = init_params(pkey)
    prepped = prepare_params(params)   # data-independent packing, done ONCE

    batch_acc = jax.random.normal(k_acc, (BATCH, 3, T_MOTION), jnp.float32)
    batch_gyro = jax.random.normal(k_gyro, (BATCH, 3, T_MOTION), jnp.float32)
    batch_audio = jax.random.normal(k_audio, (BATCH, 1, T_AUDIO), jnp.float32)
    batch_state = jax.random.normal(k_state, (BATCH, STATE_DIM), jnp.float32)

    forward = jax.jit(hmmbcr_forward)
    result = forward(prepped, batch_acc, batch_gyro, batch_audio, batch_state)
    jax.block_until_ready(result)
    assert result.shape == (BATCH, NUM_CLASSES)
    assert bool(jnp.all((result >= 0.0) & (result <= 1.0)))
    print("KERNEL_OK")
</pallas_src>

<mosaic_0001>
module attributes {stable_mosaic.version = 11 : i64} {
  func.func @_hmmbcr_kernel(%arg0: memref<32x6xf32, #tpu.memory_space<vmem>>, %arg1: memref<32x1xf32, #tpu.memory_space<vmem>>, %arg2: memref<2x8xf32, #tpu.memory_space<vmem>>, %arg3: memref<18x16xf32, #tpu.memory_space<vmem>>, %arg4: memref<48x64xbf16, #tpu.memory_space<vmem>>, %arg5: memref<8x64xbf16, #tpu.memory_space<vmem>>, %arg6: memref<64x256xbf16, #tpu.memory_space<vmem>>, %arg7: memref<16x16xbf16, #tpu.memory_space<vmem>>, %arg8: memref<96x64xbf16, #tpu.memory_space<vmem>>, %arg9: memref<8x129xf32, #tpu.memory_space<vmem>>, %arg10: memref<16x1xf32, #tpu.memory_space<vmem>>) attributes {dimension_semantics = [], scalar_prefetch = 0 : i64, scratch_operands = 0 : i64, tpu.core_type = #tpu.core_type<tc>} {
    %c0 = arith.constant 0 : index
    %c0_0 = arith.constant 0 : index
    %0 = vector.load %arg3[%c0, %c0_0] : memref<18x16xf32, #tpu.memory_space<vmem>>, vector<6x16xf32>
    %c6 = arith.constant 6 : index
    %c0_1 = arith.constant 0 : index
    %1 = vector.load %arg3[%c6, %c0_1] : memref<18x16xf32, #tpu.memory_space<vmem>>, vector<1x16xf32>
    %c7 = arith.constant 7 : index
    %c0_2 = arith.constant 0 : index
    %2 = vector.load %arg3[%c7, %c0_2] : memref<18x16xf32, #tpu.memory_space<vmem>>, vector<8x16xf32>
    %c15 = arith.constant 15 : index
    %c0_3 = arith.constant 0 : index
    %3 = vector.load %arg3[%c15, %c0_3] : memref<18x16xf32, #tpu.memory_space<vmem>>, vector<1x16xf32>
    %c16 = arith.constant 16 : index
    %c0_4 = arith.constant 0 : index
    %4 = vector.load %arg3[%c16, %c0_4] : memref<18x16xf32, #tpu.memory_space<vmem>>, vector<1x16xf32>
    %c17 = arith.constant 17 : index
    %c0_5 = arith.constant 0 : index
    %5 = vector.load %arg3[%c17, %c0_5] : memref<18x16xf32, #tpu.memory_space<vmem>>, vector<1x16xf32>
    %c0_6 = arith.constant 0 : index
    %c0_7 = arith.constant 0 : index
    %6 = vector.load %arg0[%c0_6, %c0_7] : memref<32x6xf32, #tpu.memory_space<vmem>>, vector<32x6xf32>
    %cst = arith.constant dense<0.000000e+00> : vector<32x16xf32>
    %7 = tpu.matmul %6, %0, %cst {dimension_numbers = #tpu.dot_dimension_numbers<[1], [0], [0], [1], [0, 0, 1, 1], [], []>} : vector<32x6xf32>, vector<6x16xf32>, vector<32x16xf32> -> vector<32x16xf32>
    %8 = vector.broadcast %3 : vector<1x16xf32> to vector<32x16xf32>
    %9 = arith.addf %7, %8 : vector<32x16xf32>
    %cst_8 = arith.constant 0.000000e+00 : f32
    %10 = vector.broadcast %cst_8 : f32 to vector<32x16xf32>
    %11 = arith.maximumf %9, %10 : vector<32x16xf32>
    %c0_9 = arith.constant 0 : index
    %c0_10 = arith.constant 0 : index
    %12 = vector.load %arg1[%c0_9, %c0_10] : memref<32x1xf32, #tpu.memory_space<vmem>>, vector<32x1xf32>
    %13 = vector.broadcast %12 : vector<32x1xf32> to vector<32x16xf32>
    %14 = vector.broadcast %1 : vector<1x16xf32> to vector<32x16xf32>
    %15 = arith.mulf %13, %14 : vector<32x16xf32>
    %16 = vector.broadcast %4 : vector<1x16xf32> to vector<32x16xf32>
    %17 = arith.addf %15, %16 : vector<32x16xf32>
    %cst_11 = arith.constant 0.000000e+00 : f32
    %18 = vector.broadcast %cst_11 : f32 to vector<32x16xf32>
    %19 = arith.maximumf %17, %18 : vector<32x16xf32>
    %c0_12 = arith.constant 0 : index
    %c0_13 = arith.constant 0 : index
    %20 = vector.load %arg2[%c0_12, %c0_13] : memref<2x8xf32, #tpu.memory_space<vmem>>, vector<2x8xf32>
    %cst_14 = arith.constant dense<0.000000e+00> : vector<2x16xf32>
    %21 = tpu.matmul %20, %2, %cst_14 {dimension_numbers = #tpu.dot_dimension_numbers<[1], [0], [0], [1], [0, 0, 1, 1], [], []>} : vector<2x8xf32>, vector<8x16xf32>, vector<2x16xf32> -> vector<2x16xf32>
    %22 = vector.broadcast %5 : vector<1x16xf32> to vector<2x16xf32>
    %23 = arith.addf %21, %22 : vector<2x16xf32>
    %cst_15 = arith.constant 0.000000e+00 : f32
    %24 = vector.broadcast %cst_15 : f32 to vector<2x16xf32>
    %25 = arith.maximumf %23, %24 : vector<2x16xf32>
    %c0_16 = arith.constant 0 : index
    %c0_17 = arith.constant 0 : index
    %26 = vector.load %arg4[%c0_16, %c0_17] : memref<48x64xbf16, #tpu.memory_space<vmem>>, vector<16x64xbf16>
    %c16_18 = arith.constant 16 : index
    %c0_19 = arith.constant 0 : index
    %27 = vector.load %arg4[%c16_18, %c0_19] : memref<48x64xbf16, #tpu.memory_space<vmem>>, vector<16x64xbf16>
    %c32 = arith.constant 32 : index
    %c0_20 = arith.constant 0 : index
    %28 = vector.load %arg4[%c32, %c0_20] : memref<48x64xbf16, #tpu.memory_space<vmem>>, vector<16x64xbf16>
    %29 = arith.truncf %11 : vector<32x16xf32> to vector<32x16xbf16>
    %cst_21 = arith.constant dense<0.000000e+00> : vector<32x64xf32>
    %30 = tpu.matmul %29, %26, %cst_21 {dimension_numbers = #tpu.dot_dimension_numbers<[1], [0], [0], [1], [0, 0, 1, 1], [], []>} : vector<32x16xbf16>, vector<16x64xbf16>, vector<32x64xf32> -> vector<32x64xf32>
    %cst_22 = arith.constant 0.000000e+00 : f32
    %31 = vector.broadcast %cst_22 : f32 to vector<32x64xf32>
    %32 = arith.maximumf %30, %31 : vector<32x64xf32>
    %33 = arith.truncf %19 : vector<32x16xf32> to vector<32x16xbf16>
    %cst_23 = arith.constant dense<0.000000e+00> : vector<32x64xf32>
    %34 = tpu.matmul %33, %27, %cst_23 {dimension_numbers = #tpu.dot_dimension_numbers<[1], [0], [0], [1], [0, 0, 1, 1], [], []>} : vector<32x16xbf16>, vector<16x64xbf16>, vector<32x64xf32> -> vector<32x64xf32>
    %cst_24 = arith.constant 0.000000e+00 : f32
    %35 = vector.broadcast %cst_24 : f32 to vector<32x64xf32>
    %36 = arith.maximumf %34, %35 : vector<32x64xf32>
    %37 = arith.truncf %25 : vector<2x16xf32> to vector<2x16xbf16>
    %cst_25 = arith.constant dense<0.000000e+00> : vector<2x64xf32>
    %38 = tpu.matmul %37, %28, %cst_25 {dimension_numbers = #tpu.dot_dimension_numbers<[1], [0], [0], [1], [0, 0, 1, 1], [], []>} : vector<2x16xbf16>, vector<16x64xbf16>, vector<2x64xf32> -> vector<2x64xf32>
    %cst_26 = arith.constant 0.000000e+00 : f32
    %39 = vector.broadcast %cst_26 : f32 to vector<2x64xf32>
    %40 = arith.maximumf %38, %39 : vector<2x64xf32>
    %41 = tpu.concatenate %32, %36, %40 in 0 : vector<32x64xf32>, vector<32x64xf32>, vector<2x64xf32> -> vector<66x64xf32>
    %42 = arith.truncf %41 : vector<66x64xf32> to vector<66x64xbf16>
    %c0_27 = arith.constant 0 : index
    %c0_28 = arith.constant 0 : index
    %43 = vector.load %arg5[%c0_27, %c0_28] : memref<8x64xbf16, #tpu.memory_space<vmem>>, vector<8x64xbf16>
    %c0_29 = arith.constant 0 : index
    %c0_30 = arith.constant 0 : index
    %44 = vector.load %arg6[%c0_29, %c0_30] : memref<64x256xbf16, #tpu.memory_space<vmem>>, vector<64x64xbf16>
    %cst_31 = arith.constant dense<0.000000e+00> : vector<8x64xf32>
    %45 = tpu.matmul %43, %44, %cst_31 {dimension_numbers = #tpu.dot_dimension_numbers<[1], [0], [0], [1], [0, 0, 1, 1], [], []>} : vector<8x64xbf16>, vector<64x64xbf16>, vector<8x64xf32> -> vector<8x64xf32>
    %c0_32 = arith.constant 0 : index
    %c64 = arith.constant 64 : index
    %46 = vector.load %arg6[%c0_32, %c64] : memref<64x256xbf16, #tpu.memory_space<vmem>>, vector<64x128xbf16>
    %cst_33 = arith.constant dense<0.000000e+00> : vector<66x128xf32>
    %47 = tpu.matmul %42, %46, %cst_33 {dimension_numbers = #tpu.dot_dimension_numbers<[1], [0], [0], [1], [0, 0, 1, 1], [], []>} : vector<66x64xbf16>, vector<64x128xbf16>, vector<66x128xf32> -> vector<66x128xf32>
    %48 = vector.extract_strided_slice %47 {offsets = [0, 0], sizes = [66, 64], strides = [1, 1]} : vector<66x128xf32> to vector<66x64xf32>
    %49 = arith.truncf %48 : vector<66x64xf32> to vector<66x64xbf16>
    %50 = vector.extract_strided_slice %47 {offsets = [0, 64], sizes = [66, 64], strides = [1, 1]} : vector<66x128xf32> to vector<66x64xf32>
    %51 = arith.truncf %50 : vector<66x64xf32> to vector<66x64xbf16>
    %52 = arith.truncf %45 : vector<8x64xf32> to vector<8x64xbf16>
    %cst_34 = arith.constant dense<0.000000e+00> : vector<8x66xf32>
    %53 = tpu.matmul %52, %49, %cst_34 {dimension_numbers = #tpu.dot_dimension_numbers<[1], [1], [0], [0], [0, 0, 1, 0], [], []>} : vector<8x64xbf16>, vector<66x64xbf16>, vector<8x66xf32> -> vector<8x66xf32>
    %54 = tpu.concatenate %53, %53 in 0 : vector<8x66xf32>, vector<8x66xf32> -> vector<16x66xf32>
    %55 = tpu.iota {dimensions = array<i32: 0>} : vector<16x66xi32>
    %56 = tpu.iota {dimensions = array<i32: 1>} : vector<16x66xi32>
    %c3_i32 = arith.constant 3 : i32
    %57 = vector.broadcast %c3_i32 : i32 to vector<16x66xi32>
    %58 = arith.shrui %55, %57 : vector<16x66xi32>
    %c32_i32 = arith.constant 32 : i32
    %59 = vector.broadcast %c32_i32 : i32 to vector<16x66xi32>
    %60 = arith.cmpi slt, %56, %59 : vector<16x66xi32>
    %c4_i32 = arith.constant 4 : i32
    %61 = vector.broadcast %c4_i32 : i32 to vector<16x66xi32>
    %62 = arith.shrui %56, %61 : vector<16x66xi32>
    %c64_i32 = arith.constant 64 : i32
    %63 = vector.broadcast %c64_i32 : i32 to vector<16x66xi32>
    %64 = arith.cmpi slt, %56, %63 : vector<16x66xi32>
    %c32_i32_35 = arith.constant 32 : i32
    %65 = vector.broadcast %c32_i32_35 : i32 to vector<16x66xi32>
    %66 = arith.subi %56, %65 : vector<16x66xi32>
    %c4_i32_36 = arith.constant 4 : i32
    %67 = vector.broadcast %c4_i32_36 : i32 to vector<16x66xi32>
    %68 = arith.shrui %66, %67 : vector<16x66xi32>
    %c64_i32_37 = arith.constant 64 : i32
    %69 = vector.broadcast %c64_i32_37 : i32 to vector<16x66xi32>
    %70 = arith.subi %56, %69 : vector<16x66xi32>
    %71 = arith.select %64, %68, %70 : vector<16x66xi1>, vector<16x66xi32>
    %72 = arith.select %60, %62, %71 : vector<16x66xi1>, vector<16x66xi32>
    %73 = arith.cmpi eq, %58, %72 : vector<16x66xi32>
    %cst_38 = arith.constant -1.000000e+30 : f32
    %74 = vector.broadcast %cst_38 : f32 to vector<16x66xf32>
    %75 = arith.select %73, %54, %74 : vector<16x66xi1>, vector<16x66xf32>
    %cst_39 = arith.constant dense<0xFF800000> : vector<16xf32>
    %76 = vector.multi_reduction <maximumf>, %75, %cst_39 [1] : vector<16x66xf32> to vector<16xf32>
    %77 = vector.shape_cast %76 : vector<16xf32> to vector<16x1xf32>
    %78 = vector.broadcast %77 : vector<16x1xf32> to vector<16x66xf32>
    %79 = arith.subf %75, %78 : vector<16x66xf32>
    %80 = math.exp %79 : vector<16x66xf32>
    %cst_40 = arith.constant dense<0.000000e+00> : vector<16xf32>
    %81 = vector.multi_reduction <add>, %80, %cst_40 [1] : vector<16x66xf32> to vector<16xf32>
    %82 = vector.shape_cast %81 : vector<16xf32> to vector<16x1xf32>
    %83 = tpu.reciprocal %82 {approx = true} : vector<16x1xf32> -> vector<16x1xf32>
    %84 = vector.broadcast %83 : vector<16x1xf32> to vector<16x66xf32>
    %85 = arith.mulf %80, %84 : vector<16x66xf32>
    %86 = arith.truncf %85 : vector<16x66xf32> to vector<16x66xbf16>
    %cst_41 = arith.constant dense<0.000000e+00> : vector<16x64xf32>
    %87 = tpu.matmul %86, %51, %cst_41 {dimension_numbers = #tpu.dot_dimension_numbers<[1], [0], [0], [1], [0, 0, 1, 1], [], []>} : vector<16x66xbf16>, vector<66x64xbf16>, vector<16x64xf32> -> vector<16x64xf32>
    %88 = arith.truncf %87 : vector<16x64xf32> to vector<16x64xbf16>
    %c0_42 = arith.constant 0 : index
    %c192 = arith.constant 192 : index
    %89 = vector.load %arg6[%c0_42, %c192] : memref<64x256xbf16, #tpu.memory_space<vmem>>, vector<64x64xbf16>
    %cst_43 = arith.constant dense<0.000000e+00> : vector<16x64xf32>
    %90 = tpu.matmul %88, %89, %cst_43 {dimension_numbers = #tpu.dot_dimension_numbers<[1], [0], [0], [1], [0, 0, 1, 1], [], []>} : vector<16x64xbf16>, vector<64x64xbf16>, vector<16x64xf32> -> vector<16x64xf32>
    %c0_44 = arith.constant 0 : index
    %c0_45 = arith.constant 0 : index
    %91 = vector.load %arg8[%c0_44, %c0_45] : memref<96x64xbf16, #tpu.memory_space<vmem>>, vector<64x32xbf16>
    %c64_46 = arith.constant 64 : index
    %c0_47 = arith.constant 0 : index
    %92 = vector.load %arg8[%c64_46, %c0_47] : memref<96x64xbf16, #tpu.memory_space<vmem>>, vector<32x64xbf16>
    %c0_48 = arith.constant 0 : index
    %c0_49 = arith.constant 0 : index
    %93 = vector.load %arg7[%c0_48, %c0_49] : memref<16x16xbf16, #tpu.memory_space<vmem>>, vector<16x16xbf16>
    %94 = arith.truncf %90 : vector<16x64xf32> to vector<16x64xbf16>
    %cst_50 = arith.constant dense<0.000000e+00> : vector<16x64xf32>
    %95 = tpu.matmul %93, %94, %cst_50 {dimension_numbers = #tpu.dot_dimension_numbers<[1], [0], [0], [1], [0, 0, 1, 1], [], []>} : vector<16x16xbf16>, vector<16x64xbf16>, vector<16x64xf32> -> vector<16x64xf32>
    %96 = arith.truncf %95 : vector<16x64xf32> to vector<16x64xbf16>
    %cst_51 = arith.constant dense<0.000000e+00> : vector<16x32xf32>
    %97 = tpu.matmul %96, %91, %cst_51 {dimension_numbers = #tpu.dot_dimension_numbers<[1], [0], [0], [1], [0, 0, 1, 1], [], []>} : vector<16x64xbf16>, vector<64x32xbf16>, vector<16x32xf32> -> vector<16x32xf32>
    %cst_52 = arith.constant 0.000000e+00 : f32
    %98 = vector.broadcast %cst_52 : f32 to vector<16x32xf32>
    %99 = arith.maximumf %97, %98 : vector<16x32xf32>
    %100 = arith.truncf %99 : vector<16x32xf32> to vector<16x32xbf16>
    %cst_53 = arith.constant dense<0.000000e+00> : vector<16x32xf32>
    %101 = tpu.matmul %93, %100, %cst_53 {dimension_numbers = #tpu.dot_dimension_numbers<[1], [0], [0], [1], [0, 0, 1, 1], [], []>} : vector<16x16xbf16>, vector<16x32xbf16>, vector<16x32xf32> -> vector<16x32xf32>
    %102 = arith.truncf %101 : vector<16x32xf32> to vector<16x32xbf16>
    %cst_54 = arith.constant dense<0.000000e+00> : vector<16x64xf32>
    %103 = tpu.matmul %102, %92, %cst_54 {dimension_numbers = #tpu.dot_dimension_numbers<[1], [0], [0], [1], [0, 0, 1, 1], [], []>} : vector<16x32xbf16>, vector<32x64xbf16>, vector<16x64xf32> -> vector<16x64xf32>
    %104 = tpu.concatenate %90, %103 in 1 : vector<16x64xf32>, vector<16x64xf32> -> vector<16x128xf32>
    %c0_55 = arith.constant 0 : index
    %c0_56 = arith.constant 0 : index
    %105 = vector.load %arg9[%c0_55, %c0_56] : memref<8x129xf32, #tpu.memory_space<vmem>>, vector<8x128xf32>
    %106 = tpu.concatenate %105, %105 in 0 : vector<8x128xf32>, vector<8x128xf32> -> vector<16x128xf32>
    %c0_57 = arith.constant 0 : index
    %c128 = arith.constant 128 : index
    %107 = vector.load %arg9[%c0_57, %c128] : memref<8x129xf32, #tpu.memory_space<vmem>>, vector<8x1xf32>
    %108 = tpu.concatenate %107, %107 in 0 : vector<8x1xf32>, vector<8x1xf32> -> vector<16x1xf32>
    %109 = arith.mulf %104, %106 : vector<16x128xf32>
    %cst_58 = arith.constant dense<0.000000e+00> : vector<16xf32>
    %110 = vector.multi_reduction <add>, %109, %cst_58 [1] : vector<16x128xf32> to vector<16xf32>
    %111 = vector.shape_cast %110 : vector<16xf32> to vector<16x1xf32>
    %112 = arith.addf %111, %108 : vector<16x1xf32>
    %113 = arith.negf %112 : vector<16x1xf32>
    %114 = math.exp %113 : vector<16x1xf32>
    %cst_59 = arith.constant 1.000000e+00 : f32
    %115 = vector.broadcast %cst_59 : f32 to vector<16x1xf32>
    %116 = arith.addf %115, %114 : vector<16x1xf32>
    %117 = arith.divf %115, %116 : vector<16x1xf32>
    %c0_60 = arith.constant 0 : index
    %c0_61 = arith.constant 0 : index
    %118 = vector.load %arg10[%c0_60, %c0_61] : memref<16x1xf32, #tpu.memory_space<vmem>>, vector<16x1xf32>
    tpu.vector_store %arg10[%c0_60, %c0_61], %117 {strides = array<i32>} : memref<16x1xf32, #tpu.memory_space<vmem>>, vector<16x1xf32>,
    return
  }
}

</mosaic_0001>

<llo_original>
// kernel: hmmbcr_forward.1
$region0: #{hmmbcr_forward.1}
  #allocation0 [shape = 'u32[]', space=smem, size = 0x4, offset = 0x4, fixed_abs, tag = 'smem constant byte address 0x4 - core index']
  #allocation1 [shape = 'u32[144,128]{1,0:T(1,128)}', space=vmem, size = 0x12000, scoped, tag = 'internal scratch']
  %s0 = inlined_call_operand.vmem [shape: f32[32,6], index: 0, kind: input, shape index: {}]
  %s1 = inlined_call_operand.vmem [shape: f32[32,1], index: 1, kind: input, shape index: {}]
  %s2 = inlined_call_operand.vmem [shape: f32[2,8], index: 2, kind: input, shape index: {}]
  %s3 = inlined_call_operand.vmem [shape: f32[18,16], index: 3, kind: input, shape index: {}]
  %s4 = inlined_call_operand.vmem [shape: bf16[48,64], index: 4, kind: input, shape index: {}]
  %s5 = inlined_call_operand.vmem [shape: bf16[8,64], index: 5, kind: input, shape index: {}]
  %s6 = inlined_call_operand.vmem [shape: bf16[64,256], index: 6, kind: input, shape index: {}]
  %s7 = inlined_call_operand.vmem [shape: bf16[16,16], index: 7, kind: input, shape index: {}]
  %s8 = inlined_call_operand.vmem [shape: bf16[96,64], index: 8, kind: input, shape index: {}]
  %s9 = inlined_call_operand.vmem [shape: f32[8,129], index: 9, kind: input, shape index: {}]
  %s10 = inlined_call_operand.vmem [shape: f32[16,1], index: 10, kind: output, shape index: {}]
  %s11 = sld [smem:[#allocation0]]
  $region50: #{hmmbcr_forward.1} parent=0
    _
  %s13 = ssub.s32 1, %s11
  %s14 = scalar_select 0, %s13, %s11
  // Predicated region
  $region2: #{hmmbcr_forward.1} parent=0 // pred_check
    _
  $region3: #{hmmbcr_forward.1} parent=0 // pred_check_branch
    %16 = sbr.rel (0) target = $region5
  $region4: #{hmmbcr_forward.1} parent=0 // pred_region
    _
  $region5: #{hmmbcr_forward.1} parent=0 // pred_fallthru
    _
  // Predicated region
  $region6: #{hmmbcr_forward.1} parent=0 // pred_check
    _
  $region7: #{hmmbcr_forward.1} parent=0 // pred_check_branch
    %18 = sbr.rel (0) target = $region9
  $region8: #{hmmbcr_forward.1} parent=0 // pred_region
    _
  $region9: #{hmmbcr_forward.1} parent=0 // pred_fallthru
    _
  // Predicated region
  $region10: #{hmmbcr_forward.1} parent=0 // pred_check
    _
  $region11: #{hmmbcr_forward.1} parent=0 // pred_check_branch
    %20 = sbr.rel (0) target = $region13
  $region12: #{hmmbcr_forward.1} parent=0 // pred_region
    _
  $region13: #{hmmbcr_forward.1} parent=0 // pred_fallthru
    _
  // Predicated region
  $region14: #{hmmbcr_forward.1} parent=0 // pred_check
    _
  $region15: #{hmmbcr_forward.1} parent=0 // pred_check_branch
    %22 = sbr.rel (0) target = $region17
  $region16: #{hmmbcr_forward.1} parent=0 // pred_region
    _
  $region17: #{hmmbcr_forward.1} parent=0 // pred_fallthru
    _
  // Predicated region
  $region18: #{hmmbcr_forward.1} parent=0 // pred_check
    _
  $region19: #{hmmbcr_forward.1} parent=0 // pred_check_branch
    %24 = sbr.rel (0) target = $region21
  $region20: #{hmmbcr_forward.1} parent=0 // pred_region
    _
  $region21: #{hmmbcr_forward.1} parent=0 // pred_fallthru
    _
  // Predicated region
  $region22: #{hmmbcr_forward.1} parent=0 // pred_check
    _
  $region23: #{hmmbcr_forward.1} parent=0 // pred_check_branch
    %26 = sbr.rel (0) target = $region25
  $region24: #{hmmbcr_forward.1} parent=0 // pred_region
    _
  $region25: #{hmmbcr_forward.1} parent=0 // pred_fallthru
    _
  // Predicated region
  $region26: #{hmmbcr_forward.1} parent=0 // pred_check
    _
  $region27: #{hmmbcr_forward.1} parent=0 // pred_check_branch
    %28 = sbr.rel (0) target = $region29
  $region28: #{hmmbcr_forward.1} parent=0 // pred_region
    _
  $region29: #{hmmbcr_forward.1} parent=0 // pred_fallthru
    _
  // Predicated region
  $region30: #{hmmbcr_forward.1} parent=0 // pred_check
    _
  $region31: #{hmmbcr_forward.1} parent=0 // pred_check_branch
    %30 = sbr.rel (0) target = $region33
  $region32: #{hmmbcr_forward.1} parent=0 // pred_region
    _
  $region33: #{hmmbcr_forward.1} parent=0 // pred_fallthru
    _
  // Predicated region
  $region34: #{hmmbcr_forward.1} parent=0 // pred_check
    _
  $region35: #{hmmbcr_forward.1} parent=0 // pred_check_branch
    %32 = sbr.rel (0) target = $region37
  $region36: #{hmmbcr_forward.1} parent=0 // pred_region
    _
  $region37: #{hmmbcr_forward.1} parent=0 // pred_fallthru
    _
  // Predicated region
  $region38: #{hmmbcr_forward.1} parent=0 // pred_check
    _
  $region39: #{hmmbcr_forward.1} parent=0 // pred_check_branch
    %34 = sbr.rel (0) target = $region41
  $region40: #{hmmbcr_forward.1} parent=0 // pred_region
    _
  $region41: #{hmmbcr_forward.1} parent=0 // pred_fallthru
    _
  %v36 = vld [vmem:[%s3] sm:$0x3f]
  %v37 = vld [vmem:[%s3 + $0x6] sm:$0x1]
  %v38 = vld [vmem:[%s3 + $0x7] sm:$0xff]
  %v39 = vld [vmem:[%s3 + $0xf] sm:$0x1]
  %v40 = vld [vmem:[%s3 + $0x10] sm:$0x1]
  %v41 = vld [vmem:[%s3 + $0x11] sm:$0x1]
  %v42 = vld [vmem:[%s0] sm:$0xff]
  %v43 = vld [vmem:[%s0 + $0x8] sm:$0xff]
  %v44 = vld [vmem:[%s0 + $0x10] sm:$0xff]
  %v45 = vld [vmem:[%s0 + $0x18] sm:$0xff]
  %v46 = vlaneseq
  %v47 = vshrl.u32 %v46, 7
  %v48 = vsub.s32 0, %v47
  %v49 = vrot.slane %v39, %v48
  %vm50 = vcmask 48128
  %v52 = vsel %vm50, %v42, 0
  %v55 = vsel %vm50, %v43, 0
  %v58 = vsel %vm50, %v44, 0
  %v61 = vsel %vm50, %v45, 0
  %vm63 = vcmask 1045504
  %v65 = vsel %vm63, %v36, 0
  %67 = vmatprep.subr.mxu0 0.0
  %68 = vmatpush1.msra.mxu0 0.0
  %69 = vmatprep.subr.mxu0 0.0
  %70 = vmatpush1.msra.mxu0 0.0
  %71 = vmatprep.subr.mxu0 0.0
  %72 = vmatpush1.msra.mxu0 0.0
  %73 = vmatprep.subr.mxu0 0.0
  %74 = vmatpush1.msra.mxu0 0.0
  %75 = vmatprep.subr.mxu0 0.0
  %76 = vmatpush1.msra.mxu0 0.0
  %77 = vmatprep.subr.mxu0 0.0
  %78 = vmatpush1.msra.mxu0 0.0
  %79 = vmatprep.subr.mxu0 0.0
  %80 = vmatpush1.msra.mxu0 0.0
  %81 = vmatprep.subr.mxu0 0.0
  %82 = vmatpush1.msra.mxu0 0.0
  %83 = vmatprep.subr.mxu0 0.0
  %84 = vmatpush1.msra.mxu0 0.0
  %85 = vmatprep.subr.mxu0 0.0
  %86 = vmatpush1.msra.mxu0 0.0
  %87 = vmatprep.subr.mxu0 0.0
  %88 = vmatpush1.msra.mxu0 0.0
  %89 = vmatprep.subr.mxu0 0.0
  %90 = vmatpush1.msra.mxu0 0.0
  %91 = vmatprep.subr.mxu0 0.0
  %92 = vmatpush1.msra.mxu0 0.0
  %93 = vmatprep.subr.mxu0 0.0
  %94 = vmatpush1.msra.mxu0 0.0
  %95 = vmatprep.subr.mxu0 0.0
  %96 = vmatpush1.msra.mxu0 0.0
  %97 = vmatprep.subr.mxu0 0.0
  %98 = vmatpush1.msra.mxu0 %v65
  %99 = vmatprep.subr.mxu0 0.0
  %100 = vmatpush2.msra.mxu0 0.0
  %101 = vmatprep.subr.mxu0 0.0
  %102 = vmatpush2.msra.mxu0 0.0
  %103 = vmatprep.subr.mxu0 0.0
  %104 = vmatpush2.msra.mxu0 0.0
  %105 = vmatprep.subr.mxu0 0.0
  %106 = vmatpush2.msra.mxu0 0.0
  %107 = vmatprep.subr.mxu0 0.0
  %108 = vmatpush2.msra.mxu0 0.0
  %109 = vmatprep.subr.mxu0 0.0
  %110 = vmatpush2.msra.mxu0 0.0
  %111 = vmatprep.subr.mxu0 0.0
  %112 = vmatpush2.msra.mxu0 0.0
  %113 = vmatprep.subr.mxu0 0.0
  %114 = vmatpush2.msra.mxu0 0.0
  %115 = vmatprep.subr.mxu0 0.0
  %116 = vmatpush2.msra.mxu0 0.0
  %117 = vmatprep.subr.mxu0 0.0
  %118 = vmatpush2.msra.mxu0 0.0
  %119 = vmatprep.subr.mxu0 0.0
  %120 = vmatpush2.msra.mxu0 0.0
  %121 = vmatprep.subr.mxu0 0.0
  %122 = vmatpush2.msra.mxu0 0.0
  %123 = vmatprep.subr.mxu0 0.0
  %124 = vmatpush2.msra.mxu0 0.0
  %125 = vmatprep.subr.mxu0 0.0
  %126 = vmatpush2.msra.mxu0 0.0
  %127 = vmatprep.subr.mxu0 0.0
  %128 = vmatpush2.msra.mxu0 0.0
  %129 = vmatprep.subr.mxu0 0.0
  %130 = vmatpush2.msra.mxu0 0.0
  %131 = vmatprep.mubr.f32.mxu0 0.0
  %132 = vmatmul.mubr.f32.gmra.mxu0 %v52
  %v133 = vpop.f32.mrf.mxu0
  %v134 = vadd.f32 %v49, %v133
  %v135 = vpop.f32.mrf.mxu0
  %136 = vmatprep.mubr.f32.mxu0 0.0
  %137 = vmatmul.mubr.f32.gmra.mxu0 %v55
  %v138 = vpop.f32.mrf.mxu0
  %v139 = vadd.f32 %v49, %v138
  %v140 = vpop.f32.mrf.mxu0
  %141 = vmatprep.mubr.f32.mxu0 0.0
  %142 = vmatmul.mubr.f32.gmra.mxu0 %v58
  %v143 = vpop.f32.mrf.mxu0
  %v144 = vadd.f32 %v49, %v143
  %v145 = vpop.f32.mrf.mxu0
  %146 = vmatprep.mubr.f32.mxu0 0.0
  %147 = vmatmul.mubr.f32.gmra.mxu0 %v61
  %v148 = vpop.f32.mrf.mxu0
  %v149 = vadd.f32 %v49, %v148
  %v150 = vpop.f32.mrf.mxu0
  %151 = vdwg.mxu0
  %v152 = vmax.f32 %v134, 0.0
  %v153 = vmax.f32 %v139, 0.0
  %v154 = vmax.f32 %v144, 0.0
  %v155 = vmax.f32 %v149, 0.0
  %v156 = vld [vmem:[%s1] sm:$0xff]
  %v157 = vld [vmem:[%s1 + $0x8] sm:$0xff]
  %v158 = vld [vmem:[%s1 + $0x10] sm:$0xff]
  %v159 = vld [vmem:[%s1 + $0x18] sm:$0xff]
  %161 = vset.pattern.permute.xlu0 0
  %162 = vperm.xlu0 %161, %v156
  %v163 = vpop.permute.xlu0 %162
  %166 = vset.pattern.permute.xlu0 0
  %167 = vperm.xlu0 %166, %v157
  %v168 = vpop.permute.xlu0 %167
  %171 = vset.pattern.permute.xlu0 0
  %172 = vperm.xlu0 %171, %v158
  %v173 = vpop.permute.xlu0 %172
  %176 = vset.pattern.permute.xlu0 0
  %177 = vperm.xlu0 %176, %v159
  %v178 = vpop.permute.xlu0 %177
  %v180 = vlaneseq
  %v181 = vshrl.u32 %v180, 7
  %v182 = vsub.s32 0, %v181
  %v183 = vrot.slane %v37, %v182
  %v184 = vmul.f32 %v163, %v183
  %v185 = vmul.f32 %v168, %v183
  %v186 = vmul.f32 %v173, %v183
  %v187 = vmul.f32 %v178, %v183
  %v188 = vlaneseq
  %v189 = vshrl.u32 %v188, 7
  %v190 = vsub.s32 0, %v189
  %v191 = vrot.slane %v40, %v190
  %v192 = vadd.f32 %v184, %v191
  %v193 = vadd.f32 %v185, %v191
  %v194 = vadd.f32 %v186, %v191
  %v195 = vadd.f32 %v187, %v191
  %v196 = vmax.f32 %v192, 0.0
  %v197 = vmax.f32 %v193, 0.0
  %v198 = vmax.f32 %v194, 0.0
  %v199 = vmax.f32 %v195, 0.0
  %v200 = vld [vmem:[%s2] sm:$0x3]
  %v201 = vlaneseq
  %v202 = vshrl.u32 %v201, 7
  %v203 = vsub.s32 0, %v202
  %v204 = vrot.slane %v41, %v203
  %vm205 = vcmask 64512
  %v207 = vsel %vm205, %v200, 0
  %209 = vmatprep.subr.mxu0 0.0
  %210 = vmatpush1.msra.mxu0 0.0
  %211 = vmatprep.subr.mxu0 0.0
  %212 = vmatpush1.msra.mxu0 0.0
  %213 = vmatprep.subr.mxu0 0.0
  %214 = vmatpush1.msra.mxu0 0.0
  %215 = vmatprep.subr.mxu0 0.0
  %216 = vmatpush1.msra.mxu0 0.0
  %217 = vmatprep.subr.mxu0 0.0
  %218 = vmatpush1.msra.mxu0 0.0
  %219 = vmatprep.subr.mxu0 0.0
  %220 = vmatpush1.msra.mxu0 0.0
  %221 = vmatprep.subr.mxu0 0.0
  %222 = vmatpush1.msra.mxu0 0.0
  %223 = vmatprep.subr.mxu0 0.0
  %224 = vmatpush1.msra.mxu0 0.0
  %225 = vmatprep.subr.mxu0 0.0
  %226 = vmatpush1.msra.mxu0 0.0
  %227 = vmatprep.subr.mxu0 0.0
  %228 = vmatpush1.msra.mxu0 0.0
  %229 = vmatprep.subr.mxu0 0.0
  %230 = vmatpush1.msra.mxu0 0.0
  %231 = vmatprep.subr.mxu0 0.0
  %232 = vmatpush1.msra.mxu0 0.0
  %233 = vmatprep.subr.mxu0 0.0
  %234 = vmatpush1.msra.mxu0 0.0
  %235 = vmatprep.subr.mxu0 0.0
  %236 = vmatpush1.msra.mxu0 0.0
  %237 = vmatprep.subr.mxu0 0.0
  %238 = vmatpush1.msra.mxu0 0.0
  %239 = vmatprep.subr.mxu0 0.0
  %240 = vmatpush1.msra.mxu0 %v38
  %241 = vmatprep.subr.mxu0 0.0
  %242 = vmatpush2.msra.mxu0 0.0
  %243 = vmatprep.subr.mxu0 0.0
  %244 = vmatpush2.msra.mxu0 0.0
  %245 = vmatprep.subr.mxu0 0.0
  %246 = vmatpush2.msra.mxu0 0.0
  %247 = vmatprep.subr.mxu0 0.0
  %248 = vmatpush2.msra.mxu0 0.0
  %249 = vmatprep.subr.mxu0 0.0
  %250 = vmatpush2.msra.mxu0 0.0
  %251 = vmatprep.subr.mxu0 0.0
  %252 = vmatpush2.msra.mxu0 0.0
  %253 = vmatprep.subr.mxu0 0.0
  %254 = vmatpush2.msra.mxu0 0.0
  %255 = vmatprep.subr.mxu0 0.0
  %256 = vmatpush2.msra.mxu0 0.0
  %257 = vmatprep.subr.mxu0 0.0
  %258 = vmatpush2.msra.mxu0 0.0
  %259 = vmatprep.subr.mxu0 0.0
  %260 = vmatpush2.msra.mxu0 0.0
  %261 = vmatprep.subr.mxu0 0.0
  %262 = vmatpush2.msra.mxu0 0.0
  %263 = vmatprep.subr.mxu0 0.0
  %264 = vmatpush2.msra.mxu0 0.0
  %265 = vmatprep.subr.mxu0 0.0
  %266 = vmatpush2.msra.mxu0 0.0
  %267 = vmatprep.subr.mxu0 0.0
  %268 = vmatpush2.msra.mxu0 0.0
  %269 = vmatprep.subr.mxu0 0.0
  %270 = vmatpush2.msra.mxu0 0.0
  %271 = vmatprep.subr.mxu0 0.0
  %272 = vmatpush2.msra.mxu0 0.0
  %273 = vmatprep.mubr.f32.mxu0 0.0
  %274 = vmatmul.mubr.f32.gmra.mxu0 %v207
  %v275 = vpop.f32.mrf.mxu0
  %v276 = vadd.f32 %v204, %v275
  %v277 = vpop.f32.mrf.mxu0
  %278 = vdwg.mxu0
  %v279 = vmax.f32 %v276, 0.0
  %v280 = vld [vmem:[%s4] sm:$0xf]
  %v281 = vld [vmem:[%s4 + $0x4] sm:$0xf]
  %v282 = vld [vmem:[%s4 + $0x8] sm:$0xf]
  %v283 = vld [vmem:[%s4 + $0xc] sm:$0xf]
  %v284 = vld [vmem:[%s4 + $0x10] sm:$0xf]
  %v285 = vld [vmem:[%s4 + $0x14] sm:$0xf]
  %v286 = vpack.c.bf16 %v153, %v152
  %v287 = vpack.c.bf16 %v155, %v154
  %v290 = vunpack.c.l.b16 %v280
  %v291 = vunpack.c.l.b16 %v281
  %v292 = vpack.c.b16 %v291, %v290
  %vm294 = vcmask 130048
  %v296 = vsel %vm294, %v286, 0
  %v299 = vsel %vm294, %v287, 0
  %301 = vmatprep.subr.bf16.mxu0 0
  %302 = vmatpush1.bf16.msra.mxu0 0
  %303 = vmatprep.subr.bf16.mxu0 0
  %304 = vmatpush1.bf16.msra.mxu0 0
  %305 = vmatprep.subr.bf16.mxu0 0
  %306 = vmatpush1.bf16.msra.mxu0 0
  %307 = vmatprep.subr.bf16.mxu0 0
  %308 = vmatpush1.bf16.msra.mxu0 0
  %309 = vmatprep.subr.bf16.mxu0 0
  %310 = vmatpush1.bf16.msra.mxu0 0
  %311 = vmatprep.subr.bf16.mxu0 0
  %312 = vmatpush1.bf16.msra.mxu0 0
  %313 = vmatprep.subr.bf16.mxu0 0
  %314 = vmatpush1.bf16.msra.mxu0 0
  %315 = vmatprep.subr.bf16.mxu0 0
  %316 = vmatpush1.bf16.msra.mxu0 %v292
  %317 = vmatprep.subr.bf16.mxu0 0
  %318 = vmatpush2.bf16.msra.mxu0 0
  %319 = vmatprep.subr.bf16.mxu0 0
  %320 = vmatpush2.bf16.msra.mxu0 0
  %321 = vmatprep.subr.bf16.mxu0 0
  %322 = vmatpush2.bf16.msra.mxu0 0
  %323 = vmatprep.subr.bf16.mxu0 0
  %324 = vmatpush2.bf16.msra.mxu0 0
  %325 = vmatprep.subr.bf16.mxu0 0
  %326 = vmatpush2.bf16.msra.mxu0 0
  %327 = vmatprep.subr.bf16.mxu0 0
  %328 = vmatpush2.bf16.msra.mxu0 0
  %329 = vmatprep.subr.bf16.mxu0 0
  %330 = vmatpush2.bf16.msra.mxu0 0
  %331 = vmatprep.subr.bf16.mxu0 0
  %332 = vmatpush2.bf16.msra.mxu0 0
  %333 = vmatprep.mubr.bf16.mxu0 0
  %334 = vmatmul.mubr.bf16.gmra.mxu0 %v296
  %v335 = vpop.f32.mrf.mxu0
  %v336 = vadd.f32 0.0, %v335
  %v337 = vpop.f32.mrf.mxu0
  %v338 = vpop.f32.mrf.mxu0
  %v339 = vadd.f32 0.0, %v338
  %v340 = vpop.f32.mrf.mxu0
  %341 = vmatprep.mubr.bf16.mxu0 0
  %342 = vmatmul.mubr.bf16.gmra.mxu0 %v299
  %v343 = vpop.f32.mrf.mxu0
  %v344 = vadd.f32 0.0, %v343
  %v345 = vpop.f32.mrf.mxu0
  %v346 = vpop.f32.mrf.mxu0
  %v347 = vadd.f32 0.0, %v346
  %v348 = vpop.f32.mrf.mxu0
  %349 = vdwg.mxu0
  %v350 = vmax.f32 %v336, 0.0
  %v351 = vmax.f32 %v339, 0.0
  %v352 = vmax.f32 %v344, 0.0
  %v353 = vmax.f32 %v347, 0.0
  %v354 = vpack.c.bf16 %v197, %v196
  %v355 = vpack.c.bf16 %v199, %v198
  %v358 = vunpack.c.l.b16 %v282
  %v359 = vunpack.c.l.b16 %v283
  %v360 = vpack.c.b16 %v359, %v358
  %v363 = vsel %vm294, %v354, 0
  %v366 = vsel %vm294, %v355, 0
  %368 = vmatprep.subr.bf16.mxu0 0
  %369 = vmatpush1.bf16.msra.mxu0 0
  %370 = vmatprep.subr.bf16.mxu0 0
  %371 = vmatpush1.bf16.msra.mxu0 0
  %372 = vmatprep.subr.bf16.mxu0 0
  %373 = vmatpush1.bf16.msra.mxu0 0
  %374 = vmatprep.subr.bf16.mxu0 0
  %375 = vmatpush1.bf16.msra.mxu0 0
  %376 = vmatprep.subr.bf16.mxu0 0
  %377 = vmatpush1.bf16.msra.mxu0 0
  %378 = vmatprep.subr.bf16.mxu0 0
  %379 = vmatpush1.bf16.msra.mxu0 0
  %380 = vmatprep.subr.bf16.mxu0 0
  %381 = vmatpush1.bf16.msra.mxu0 0
  %382 = vmatprep.subr.bf16.mxu0 0
  %383 = vmatpush1.bf16.msra.mxu0 %v360
  %384 = vmatprep.subr.bf16.mxu0 0
  %385 = vmatpush2.bf16.msra.mxu0 0
  %386 = vmatprep.subr.bf16.mxu0 0
  %387 = vmatpush2.bf16.msra.mxu0 0
  %388 = vmatprep.subr.bf16.mxu0 0
  %389 = vmatpush2.bf16.msra.mxu0 0
  %390 = vmatprep.subr.bf16.mxu0 0
  %391 = vmatpush2.bf16.msra.mxu0 0
  %392 = vmatprep.subr.bf16.mxu0 0
  %393 = vmatpush2.bf16.msra.mxu0 0
  %394 = vmatprep.subr.bf16.mxu0 0
  %395 = vmatpush2.bf16.msra.mxu0 0
  %396 = vmatprep.subr.bf16.mxu0 0
  %397 = vmatpush2.bf16.msra.mxu0 0
  %398 = vmatprep.subr.bf16.mxu0 0
  %399 = vmatpush2.bf16.msra.mxu0 0
  %400 = vmatprep.mubr.bf16.mxu0 0
  %401 = vmatmul.mubr.bf16.gmra.mxu0 %v363
  %v402 = vpop.f32.mrf.mxu0
  %v403 = vadd.f32 0.0, %v402
  %v404 = vpop.f32.mrf.mxu0
  %v405 = vpop.f32.mrf.mxu0
  %v406 = vadd.f32 0.0, %v405
  %v407 = vpop.f32.mrf.mxu0
  %408 = vmatprep.mubr.bf16.mxu0 0
  %409 = vmatmul.mubr.bf16.gmra.mxu0 %v366
  %v410 = vpop.f32.mrf.mxu0
  %v411 = vadd.f32 0.0, %v410
  %v412 = vpop.f32.mrf.mxu0
  %v413 = vpop.f32.mrf.mxu0
  %v414 = vadd.f32 0.0, %v413
  %v415 = vpop.f32.mrf.mxu0
  %416 = vdwg.mxu0
  %v417 = vmax.f32 %v403, 0.0
  %v418 = vmax.f32 %v406, 0.0
  %v419 = vmax.f32 %v411, 0.0
  %v420 = vmax.f32 %v414, 0.0
  %v421 = vpack.c.bf16 %v279, %v279
  %v424 = vunpack.c.l.b16 %v284
  %v425 = vunpack.c.l.b16 %v285
  %v426 = vpack.c.b16 %v425, %v424
  %v429 = vsel %vm294, %v421, 0
  %431 = vmatprep.subr.bf16.mxu0 0
  %432 = vmatpush1.bf16.msra.mxu0 0
  %433 = vmatprep.subr.bf16.mxu0 0
  %434 = vmatpush1.bf16.msra.mxu0 0
  %435 = vmatprep.subr.bf16.mxu0 0
  %436 = vmatpush1.bf16.msra.mxu0 0
  %437 = vmatprep.subr.bf16.mxu0 0
  %438 = vmatpush1.bf16.msra.mxu0 0
  %439 = vmatprep.subr.bf16.mxu0 0
  %440 = vmatpush1.bf16.msra.mxu0 0
  %441 = vmatprep.subr.bf16.mxu0 0
  %442 = vmatpush1.bf16.msra.mxu0 0
  %443 = vmatprep.subr.bf16.mxu0 0
  %444 = vmatpush1.bf16.msra.mxu0 0
  %445 = vmatprep.subr.bf16.mxu0 0
  %446 = vmatpush1.bf16.msra.mxu0 %v426
  %447 = vmatprep.subr.bf16.mxu0 0
  %448 = vmatpush2.bf16.msra.mxu0 0
  %449 = vmatprep.subr.bf16.mxu0 0
  %450 = vmatpush2.bf16.msra.mxu0 0
  %451 = vmatprep.subr.bf16.mxu0 0
  %452 = vmatpush2.bf16.msra.mxu0 0
  %453 = vmatprep.subr.bf16.mxu0 0
  %454 = vmatpush2.bf16.msra.mxu0 0
  %455 = vmatprep.subr.bf16.mxu0 0
  %456 = vmatpush2.bf16.msra.mxu0 0
  %457 = vmatprep.subr.bf16.mxu0 0
  %458 = vmatpush2.bf16.msra.mxu0 0
  %459 = vmatprep.subr.bf16.mxu0 0
  %460 = vmatpush2.bf16.msra.mxu0 0
  %461 = vmatprep.subr.bf16.mxu0 0
  %462 = vmatpush2.bf16.msra.mxu0 0
  %463 = vmatprep.mubr.bf16.mxu0 0
  %464 = vmatmul.mubr.bf16.gmra.mxu0 %v429
  %v465 = vpop.f32.mrf.mxu0
  %v466 = vadd.f32 0.0, %v465
  %v467 = vpop.f32.mrf.mxu0
  %v468 = vpop.f32.mrf.mxu0
  %v469 = vpop.f32.mrf.mxu0
  %470 = vdwg.mxu0
  %v471 = vmax.f32 %v466, 0.0
  %v472 = vpack.c.bf16 %v351, %v350
  %v473 = vpack.c.bf16 %v353, %v352
  %v474 = vpack.c.bf16 %v418, %v417
  %v475 = vpack.c.bf16 %v420, %v419
  %v476 = vpack.c.bf16 %v471, %v471
  %v477 = vld [vmem:[%s5] sm:$0xf]
  %v478 = vld [vmem:[%s6] sm:$0xf]
  %v479 = vld [vmem:[%s6 + $0x8] sm:$0xf]
  %v480 = vld [vmem:[%s6 + $0x10] sm:$0xf]
  %v481 = vld [vmem:[%s6 + $0x18] sm:$0xf]
  %v482 = vld [vmem:[%s6 + $0x20] sm:$0xf]
  %v483 = vld [vmem:[%s6 + $0x28] sm:$0xf]
  %v484 = vld [vmem:[%s6 + $0x30] sm:$0xf]
  %v485 = vld [vmem:[%s6 + $0x38] sm:$0xf]
  %v494 = vunpack.c.l.b16 %v478
  %v495 = vunpack.c.l.b16 %v479
  %v496 = vunpack.c.l.b16 %v480
  %v497 = vunpack.c.l.b16 %v481
  %v498 = vunpack.c.l.b16 %v482
  %v499 = vunpack.c.l.b16 %v483
  %v500 = vunpack.c.l.b16 %v484
  %v501 = vunpack.c.l.b16 %v485
  %v502 = vpack.c.b16 %v495, %v494
  %v503 = vpack.c.b16 %v497, %v496
  %v504 = vpack.c.b16 %v499, %v498
  %v505 = vpack.c.b16 %v501, %v500
  %vm510 = vcmask 523264
  %v512 = vsel %vm510, %v477, 0
  %514 = vmatprep.subr.bf16.mxu0 0
  %515 = vmatpush1.bf16.msra.mxu0 0
  %516 = vmatprep.subr.bf16.mxu0 0
  %517 = vmatpush1.bf16.msra.mxu0 0
  %518 = vmatprep.subr.bf16.mxu0 0
  %519 = vmatpush1.bf16.msra.mxu0 0
  %520 = vmatprep.subr.bf16.mxu0 0
  %521 = vmatpush1.bf16.msra.mxu0 0
  %522 = vmatprep.subr.bf16.mxu0 0
  %523 = vmatpush1.bf16.msra.mxu0 %v505
  %524 = vmatprep.subr.bf16.mxu0 0
  %525 = vmatpush1.bf16.msra.mxu0 %v504
  %526 = vmatprep.subr.bf16.mxu0 0
  %527 = vmatpush1.bf16.msra.mxu0 %v503
  %528 = vmatprep.subr.bf16.mxu0 0
  %529 = vmatpush1.bf16.msra.mxu0 %v502
  %530 = vmatprep.subr.bf16.mxu0 0
  %531 = vmatpush2.bf16.msra.mxu0 0
  %532 = vmatprep.subr.bf16.mxu0 0
  %533 = vmatpush2.bf16.msra.mxu0 0
  %534 = vmatprep.subr.bf16.mxu0 0
  %535 = vmatpush2.bf16.msra.mxu0 0
  %536 = vmatprep.subr.bf16.mxu0 0
  %537 = vmatpush2.bf16.msra.mxu0 0
  %538 = vmatprep.subr.bf16.mxu0 0
  %539 = vmatpush2.bf16.msra.mxu0 0
  %540 = vmatprep.subr.bf16.mxu0 0
  %541 = vmatpush2.bf16.msra.mxu0 0
  %542 = vmatprep.subr.bf16.mxu0 0
  %543 = vmatpush2.bf16.msra.mxu0 0
  %544 = vmatprep.subr.bf16.mxu0 0
  %545 = vmatpush2.bf16.msra.mxu0 0
  %546 = vmatprep.mubr.bf16.mxu0 0
  %547 = vmatmul.mubr.bf16.gmra.mxu0 %v512
  %v548 = vpop.f32.mrf.mxu0
  %v549 = vadd.f32 0.0, %v548
  %v550 = vpop.f32.mrf.mxu0
  %v551 = vpop.f32.mrf.mxu0
  %v552 = vpop.f32.mrf.mxu0
  %553 = vdwg.mxu0
  %v554 = vld [vmem:[%s6] sm:$0xff]
  %v555 = vld [vmem:[%s6 + $0x8] sm:$0xff]
  %v556 = vld [vmem:[%s6 + $0x10] sm:$0xff]
  %v557 = vld [vmem:[%s6 + $0x18] sm:$0xff]
  %v558 = vld [vmem:[%s6 + $0x20] sm:$0xff]
  %v559 = vld [vmem:[%s6 + $0x28] sm:$0xff]
  %v560 = vld [vmem:[%s6 + $0x30] sm:$0xff]
  %v561 = vld [vmem:[%s6 + $0x38] sm:$0xff]
  %v570 = vunpack.c.l.b16 %v554
  %v571 = vunpack.c.h.b16 %v554
  %v572 = vunpack.c.l.b16 %v555
  %v573 = vunpack.c.h.b16 %v555
  %v574 = vunpack.c.l.b16 %v556
  %v575 = vunpack.c.h.b16 %v556
  %v576 = vunpack.c.l.b16 %v557
  %v577 = vunpack.c.h.b16 %v557
  %v578 = vunpack.c.l.b16 %v558
  %v579 = vunpack.c.h.b16 %v558
  %v580 = vunpack.c.l.b16 %v559
  %v581 = vunpack.c.h.b16 %v559
  %v582 = vunpack.c.l.b16 %v560
  %v583 = vunpack.c.h.b16 %v560
  %v584 = vunpack.c.l.b16 %v561
  %v585 = vunpack.c.h.b16 %v561
  %v586 = vpack.c.b16 %v572, %v570
  %v587 = vpack.c.b16 %v573, %v571
  %v588 = vpack.c.b16 %v576, %v574
  %v589 = vpack.c.b16 %v577, %v575
  %v590 = vpack.c.b16 %v580, %v578
  %v591 = vpack.c.b16 %v581, %v579
  %v592 = vpack.c.b16 %v584, %v582
  %v593 = vpack.c.b16 %v585, %v583
  %594 = vrot.lane.b32.xlu0 %v586, 64
  %v595 = vpop.permute.xlu0 %594
  %596 = vrot.lane.b32.xlu0 %v587, 64
  %v597 = vpop.permute.xlu0 %596
  %598 = vrot.lane.b32.xlu0 %v588, 64
  %v599 = vpop.permute.xlu0 %598
  %600 = vrot.lane.b32.xlu0 %v589, 64
  %v601 = vpop.permute.xlu0 %600
  %602 = vrot.lane.b32.xlu0 %v590, 64
  %v603 = vpop.permute.xlu0 %602
  %604 = vrot.lane.b32.xlu0 %v591, 64
  %v605 = vpop.permute.xlu0 %604
  %606 = vrot.lane.b32.xlu0 %v592, 64
  %v607 = vpop.permute.xlu0 %606
  %608 = vrot.lane.b32.xlu0 %v593, 64
  %v609 = vpop.permute.xlu0 %608
  %vm610 = vcmask 523264
  %v611 = vsel %vm610, %v595, %v597
  %v612 = vsel %vm610, %v599, %v601
  %v613 = vsel %vm610, %v603, %v605
  %v614 = vsel %vm610, %v607, %v609
  %v620 = vsel %vm510, %v472, 0
  %v623 = vsel %vm510, %v473, 0
  %v626 = vsel %vm510, %v474, 0
  %v629 = vsel %vm510, %v475, 0
  %v632 = vsel %vm510, %v476, 0
  %634 = vmatprep.subr.bf16.mxu0 0
  %635 = vmatpush1.bf16.msra.mxu0 0
  %636 = vmatprep.subr.bf16.mxu0 0
  %637 = vmatpush1.bf16.msra.mxu0 0
  %638 = vmatprep.subr.bf16.mxu0 0
  %639 = vmatpush1.bf16.msra.mxu0 0
  %640 = vmatprep.subr.bf16.mxu0 0
  %641 = vmatpush1.bf16.msra.mxu0 0
  %642 = vmatprep.subr.bf16.mxu0 0
  %643 = vmatpush1.bf16.msra.mxu0 %v614
  %644 = vmatprep.subr.bf16.mxu0 0
  %645 = vmatpush1.bf16.msra.mxu0 %v613
  %646 = vmatprep.subr.bf16.mxu0 0
  %647 = vmatpush1.bf16.msra.mxu0 %v612
  %648 = vmatprep.subr.bf16.mxu0 0
  %649 = vmatpush1.bf16.msra.mxu0 %v611
  %650 = vmatprep.subr.bf16.mxu0 0
  %651 = vmatpush2.bf16.msra.mxu0 0
  %652 = vmatprep.subr.bf16.mxu0 0
  %653 = vmatpush2.bf16.msra.mxu0 0
  %654 = vmatprep.subr.bf16.mxu0 0
  %655 = vmatpush2.bf16.msra.mxu0 0
  %656 = vmatprep.subr.bf16.mxu0 0
  %657 = vmatpush2.bf16.msra.mxu0 0
  %658 = vmatprep.subr.bf16.mxu0 0
  %659 = vmatpush2.bf16.msra.mxu0 0
  %660 = vmatprep.subr.bf16.mxu0 0
  %661 = vmatpush2.bf16.msra.mxu0 0
  %662 = vmatprep.subr.bf16.mxu0 0
  %663 = vmatpush2.bf16.msra.mxu0 0
  %664 = vmatprep.subr.bf16.mxu0 0
  %665 = vmatpush2.bf16.msra.mxu0 0
  %666 = vmatprep.mubr.bf16.mxu0 0
  %667 = vmatmul.mubr.bf16.gmra.mxu0 %v620
  %v668 = vpop.f32.mrf.mxu0
  %v669 = vadd.f32 0.0, %v668
  %v670 = vpop.f32.mrf.mxu0
  %v671 = vpop.f32.mrf.mxu0
  %v672 = vadd.f32 0.0, %v671
  %v673 = vpop.f32.mrf.mxu0
  %674 = vmatprep.mubr.bf16.mxu0 0
  %675 = vmatmul.mubr.bf16.gmra.mxu0 %v623
  %v676 = vpop.f32.mrf.mxu0
  %v677 = vadd.f32 0.0, %v676
  %v678 = vpop.f32.mrf.mxu0
  %v679 = vpop.f32.mrf.mxu0
  %v680 = vadd.f32 0.0, %v679
  %v681 = vpop.f32.mrf.mxu0
  %682 = vmatprep.mubr.bf16.mxu0 0
  %683 = vmatmul.mubr.bf16.gmra.mxu0 %v626
  %v684 = vpop.f32.mrf.mxu0
  %v685 = vadd.f32 0.0, %v684
  %v686 = vpop.f32.mrf.mxu0
  %v687 = vpop.f32.mrf.mxu0
  %v688 = vadd.f32 0.0, %v687
  %v689 = vpop.f32.mrf.mxu0
  %690 = vmatprep.mubr.bf16.mxu0 0
  %691 = vmatmul.mubr.bf16.gmra.mxu0 %v629
  %v692 = vpop.f32.mrf.mxu0
  %v693 = vadd.f32 0.0, %v692
  %v694 = vpop.f32.mrf.mxu0
  %v695 = vpop.f32.mrf.mxu0
  %v696 = vadd.f32 0.0, %v695
  %v697 = vpop.f32.mrf.mxu0
  %698 = vmatprep.mubr.bf16.mxu0 0
  %699 = vmatmul.mubr.bf16.gmra.mxu0 %v632
  %v700 = vpop.f32.mrf.mxu0
  %v701 = vadd.f32 0.0, %v700
  %v702 = vpop.f32.mrf.mxu0
  %v703 = vpop.f32.mrf.mxu0
  %v704 = vpop.f32.mrf.mxu0
  %705 = vdwg.mxu0
  %v706 = vpack.c.bf16 %v672, %v669
  %v707 = vpack.c.bf16 %v680, %v677
  %v708 = vpack.c.bf16 %v688, %v685
  %v709 = vpack.c.bf16 %v696, %v693
  %v710 = vpack.c.bf16 %v701, %v701
  %v711 = vpack.c.bf16 %v549, %v549
  %v713 = vsel %vm510, %v711, 0
  %v716 = vsel %vm510, %v706, 0
  %v719 = vsel %vm510, %v707, 0
  %v722 = vsel %vm510, %v708, 0
  %v725 = vsel %vm510, %v709, 0
  %v728 = vsel %vm510, %v710, 0
  %730 = vmatprep.subr.bf16.mxu0 0
  %731 = vmatpush1.bf16.xpose.msra.mxu0 0
  %732 = vmatprep.subr.bf16.mxu0 0
  %733 = vmatpush1.bf16.xpose.msra.mxu0 0
  %734 = vmatprep.subr.bf16.mxu0 0
  %735 = vmatpush1.bf16.xpose.msra.mxu0 0
  %736 = vmatprep.subr.bf16.mxu0 0
  %737 = vmatpush1.bf16.xpose.msra.mxu0 %v728
  %738 = vmatprep.subr.bf16.mxu0 0
  %739 = vmatpush1.bf16.xpose.msra.mxu0 %v725
  %740 = vmatprep.subr.bf16.mxu0 0
  %741 = vmatpush1.bf16.xpose.msra.mxu0 %v722
  %742 = vmatprep.subr.bf16.mxu0 0
  %743 = vmatpush1.bf16.xpose.msra.mxu0 %v719
  %744 = vmatprep.subr.bf16.mxu0 0
  %745 = vmatpush1.bf16.xpose.msra.mxu0 %v716
  %746 = vmatprep.subr.bf16.mxu0 0
  %747 = vmatpush2.bf16.xpose.msra.mxu0 0
  %748 = vmatprep.subr.bf16.mxu0 0
  %749 = vmatpush2.bf16.xpose.msra.mxu0 0
  %750 = vmatprep.subr.bf16.mxu0 0
  %751 = vmatpush2.bf16.xpose.msra.mxu0 0
  %752 = vmatprep.subr.bf16.mxu0 0
  %753 = vmatpush2.bf16.xpose.msra.mxu0 0
  %754 = vmatprep.subr.bf16.mxu0 0
  %755 = vmatpush2.bf16.xpose.msra.mxu0 0
  %756 = vmatprep.subr.bf16.mxu0 0
  %757 = vmatpush2.bf16.xpose.msra.mxu0 0
  %758 = vmatprep.subr.bf16.mxu0 0
  %759 = vmatpush2.bf16.xpose.msra.mxu0 0
  %760 = vmatprep.subr.bf16.mxu0 0
  %761 = vmatpush2.bf16.xpose.msra.mxu0 0
  %762 = vmatprep.mubr.bf16.mxu0 0
  %763 = vmatmul.mubr.bf16.gmra.mxu0 %v713
  %v764 = vpop.f32.mrf.mxu0
  %v765 = vadd.f32 0.0, %v764
  %v766 = vpop.f32.mrf.mxu0
  %v767 = vpop.f32.mrf.mxu0
  %v768 = vpop.f32.mrf.mxu0
  %769 = vdwg.mxu0
  %v770 = vlaneseq
  %v771 = vshrl.u32 %v770, 7
  %v772 = vadd.s32 %v771, 8
  %v773 = vlaneseq
  %v774 = vand.u32 %v773, 127
  %v775 = vshrl.u32 %v771, 3
  %v776 = vshrl.u32 %v772, 3
  %vm777 = vcmp.lt.s32.totalorder %v774, 32
  %v778 = vshrl.u32 %v774, 4
  %vm779 = vcmp.lt.s32.totalorder %v774, 64
  %v780 = vsub.s32 %v774, 32
  %v781 = vshrl.u32 %v780, 4
  %v782 = vsub.s32 %v774, 64
  %v783 = vsel %vm779, %v781, %v782
  %v784 = vsel %vm777, %v778, %v783
  %vm785 = vcmp.eq.s32.totalorder %v775, %v784
  %vm786 = vcmp.eq.s32.totalorder %v776, %v784
  %v787 = vsel %vm785, %v765, -1e+30
  %v788 = vsel %vm786, %v765, -1e+30
  %vm789 = vcmask 539648
  %v790 = vsel %vm789, %v787, -inf
  %791 = vmax.xlane.f32.xlu0 %v790
  %v792 = vpop.xlane.xlu0 %791
  %v793 = vsel %vm789, %v788, -inf
  %794 = vmax.xlane.f32.xlu0 %v793
  %v795 = vpop.xlane.xlu0 %794
  %v796 = vsub.f32 %v787, %v792
  %v797 = vsub.f32 %v788, %v795
  %v798 = vmul.f32 %v796, 1.442695
  %v799 = vpow.pop %v798
  %v800 = vmul.f32 %v797, 1.442695
  %v801 = vpow.pop %v800
  %v802 = vsel %vm789, %v799, 0.0
  %803 = vadd.xlane.f32.xlu0 %v802
  %v804 = vpop.xlane.xlu0 %803
  %v805 = vsel %vm789, %v801, 0.0
  %806 = vadd.xlane.f32.xlu0 %v805
  %v807 = vpop.xlane.xlu0 %806
  %v808 = vrcp.pop %v804
  %v809 = vrcp.pop %v807
  %v810 = vmul.f32 %v799, %v808
  %v811 = vmul.f32 %v801, %v809
  %v812 = vpack.c.bf16 %v811, %v810
  %818 = vrot.lane.b32.xlu0 %v706, 64
  %v819 = vpop.permute.xlu0 %818
  %820 = vrot.lane.b32.xlu0 %v707, 64
  %v821 = vpop.permute.xlu0 %820
  %822 = vrot.lane.b32.xlu0 %v708, 64
  %v823 = vpop.permute.xlu0 %822
  %824 = vrot.lane.b32.xlu0 %v709, 64
  %v825 = vpop.permute.xlu0 %824
  %826 = vrot.lane.b32.xlu0 %v710, 64
  %v827 = vpop.permute.xlu0 %826
  %v833 = vsel %vm789, %v812, 0
  %vm835 = vcmask 1040384
  %v837 = vsel %vm835, %v827, 0
  %839 = vmatprep.subr.bf16.mxu0 0
  %840 = vmatpush1.bf16.msra.mxu0 0
  %841 = vmatprep.subr.bf16.mxu0 0
  %842 = vmatpush1.bf16.msra.mxu0 0
  %843 = vmatprep.subr.bf16.mxu0 0
  %844 = vmatpush1.bf16.msra.mxu0 0
  %845 = vmatprep.subr.bf16.mxu0 0
  %846 = vmatpush1.bf16.msra.mxu0 %v837
  %847 = vmatprep.subr.bf16.mxu0 0
  %848 = vmatpush1.bf16.msra.mxu0 %v825
  %849 = vmatprep.subr.bf16.mxu0 0
  %850 = vmatpush1.bf16.msra.mxu0 %v823
  %851 = vmatprep.subr.bf16.mxu0 0
  %852 = vmatpush1.bf16.msra.mxu0 %v821
  %853 = vmatprep.subr.bf16.mxu0 0
  %854 = vmatpush1.bf16.msra.mxu0 %v819
  %855 = vmatprep.subr.bf16.mxu0 0
  %856 = vmatpush2.bf16.msra.mxu0 0
  %857 = vmatprep.subr.bf16.mxu0 0
  %858 = vmatpush2.bf16.msra.mxu0 0
  %859 = vmatprep.subr.bf16.mxu0 0
  %860 = vmatpush2.bf16.msra.mxu0 0
  %861 = vmatprep.subr.bf16.mxu0 0
  %862 = vmatpush2.bf16.msra.mxu0 0
  %863 = vmatprep.subr.bf16.mxu0 0
  %864 = vmatpush2.bf16.msra.mxu0 0
  %865 = vmatprep.subr.bf16.mxu0 0
  %866 = vmatpush2.bf16.msra.mxu0 0
  %867 = vmatprep.subr.bf16.mxu0 0
  %868 = vmatpush2.bf16.msra.mxu0 0
  %869 = vmatprep.subr.bf16.mxu0 0
  %870 = vmatpush2.bf16.msra.mxu0 0
  %871 = vmatprep.mubr.bf16.mxu0 0
  %872 = vmatmul.mubr.bf16.gmra.mxu0 %v833
  %v873 = vpop.f32.mrf.mxu0
  %v874 = vadd.f32 0.0, %v873
  %v875 = vpop.f32.mrf.mxu0
  %v876 = vpop.f32.mrf.mxu0
  %v877 = vadd.f32 0.0, %v876
  %v878 = vpop.f32.mrf.mxu0
  %879 = vdwg.mxu0
  %v880 = vpack.c.bf16 %v877, %v874
  %v881 = vld [vmem:[%s6 + $0x4] sm:$0xf]
  %v882 = vld [vmem:[%s6 + $0xc] sm:$0xf]
  %v883 = vld [vmem:[%s6 + $0x14] sm:$0xf]
  %v884 = vld [vmem:[%s6 + $0x1c] sm:$0xf]
  %v885 = vld [vmem:[%s6 + $0x24] sm:$0xf]
  %v886 = vld [vmem:[%s6 + $0x2c] sm:$0xf]
  %v887 = vld [vmem:[%s6 + $0x34] sm:$0xf]
  %v888 = vld [vmem:[%s6 + $0x3c] sm:$0xf]
  %v897 = vunpack.c.l.b16 %v881
  %v898 = vunpack.c.l.b16 %v882
  %v899 = vunpack.c.l.b16 %v883
  %v900 = vunpack.c.l.b16 %v884
  %v901 = vunpack.c.l.b16 %v885
  %v902 = vunpack.c.l.b16 %v886
  %v903 = vunpack.c.l.b16 %v887
  %v904 = vunpack.c.l.b16 %v888
  %v905 = vpack.c.b16 %v898, %v897
  %v906 = vpack.c.b16 %v900, %v899
  %v907 = vpack.c.b16 %v902, %v901
  %v908 = vpack.c.b16 %v904, %v903
  %909 = vrot.lane.b32.xlu0 %v905, 64
  %v910 = vpop.permute.xlu0 %909
  %911 = vrot.lane.b32.xlu0 %v906, 64
  %v912 = vpop.permute.xlu0 %911
  %913 = vrot.lane.b32.xlu0 %v907, 64
  %v914 = vpop.permute.xlu0 %913
  %915 = vrot.lane.b32.xlu0 %v908, 64
  %v916 = vpop.permute.xlu0 %915
  %v922 = vsel %vm510, %v880, 0
  %924 = vmatprep.subr.bf16.mxu0 0
  %925 = vmatpush1.bf16.msra.mxu0 0
  %926 = vmatprep.subr.bf16.mxu0 0
  %927 = vmatpush1.bf16.msra.mxu0 0
  %928 = vmatprep.subr.bf16.mxu0 0
  %929 = vmatpush1.bf16.msra.mxu0 0
  %930 = vmatprep.subr.bf16.mxu0 0
  %931 = vmatpush1.bf16.msra.mxu0 0
  %932 = vmatprep.subr.bf16.mxu0 0
  %933 = vmatpush1.bf16.msra.mxu0 %v916
  %934 = vmatprep.subr.bf16.mxu0 0
  %935 = vmatpush1.bf16.msra.mxu0 %v914
  %936 = vmatprep.subr.bf16.mxu0 0
  %937 = vmatpush1.bf16.msra.mxu0 %v912
  %938 = vmatprep.subr.bf16.mxu0 0
  %939 = vmatpush1.bf16.msra.mxu0 %v910
  %940 = vmatprep.subr.bf16.mxu0 0
  %941 = vmatpush2.bf16.msra.mxu0 0
  %942 = vmatprep.subr.bf16.mxu0 0
  %943 = vmatpush2.bf16.msra.mxu0 0
  %944 = vmatprep.subr.bf16.mxu0 0
  %945 = vmatpush2.bf16.msra.mxu0 0
  %946 = vmatprep.subr.bf16.mxu0 0
  %947 = vmatpush2.bf16.msra.mxu0 0
  %948 = vmatprep.subr.bf16.mxu0 0
  %949 = vmatpush2.bf16.msra.mxu0 0
  %950 = vmatprep.subr.bf16.mxu0 0
  %951 = vmatpush2.bf16.msra.mxu0 0
  %952 = vmatprep.subr.bf16.mxu0 0
  %953 = vmatpush2.bf16.msra.mxu0 0
  %954 = vmatprep.subr.bf16.mxu0 0
  %955 = vmatpush2.bf16.msra.mxu0 0
  %956 = vmatprep.mubr.bf16.mxu0 0
  %957 = vmatmul.mubr.bf16.gmra.mxu0 %v922
  %v958 = vpop.f32.mrf.mxu0
  %v959 = vadd.f32 0.0, %v958
  %v960 = vpop.f32.mrf.mxu0
  %v961 = vpop.f32.mrf.mxu0
  %v962 = vadd.f32 0.0, %v961
  %v963 = vpop.f32.mrf.mxu0
  %964 = vdwg.mxu0
  %v965 = vld [vmem:[%s8] sm:$0xf]
  %v966 = vld [vmem:[%s8 + $0x4] sm:$0xf]
  %v967 = vld [vmem:[%s8 + $0x8] sm:$0xf]
  %v968 = vld [vmem:[%s8 + $0xc] sm:$0xf]
  %v969 = vld [vmem:[%s8 + $0x10] sm:$0xf]
  %v970 = vld [vmem:[%s8 + $0x14] sm:$0xf]
  %v971 = vld [vmem:[%s8 + $0x18] sm:$0xf]
  %v972 = vld [vmem:[%s8 + $0x1c] sm:$0xf]
  %v973 = vld [vmem:[%s8 + $0x20] sm:$0xf]
  %v974 = vld [vmem:[%s8 + $0x24] sm:$0xf]
  %v975 = vld [vmem:[%s8 + $0x28] sm:$0xf]
  %v976 = vld [vmem:[%s8 + $0x2c] sm:$0xf]
  %v977 = vld [vmem:[%s7] sm:$0xf]
  %v978 = vld [vmem:[%s7 + $0x4] sm:$0xf]
  %v979 = vpack.c.bf16 %v962, %v959
  %v982 = vunpack.c.l.b16 %v977
  %v983 = vunpack.c.l.b16 %v978
  %v984 = vpack.c.b16 %v983, %v982
  %v986 = vsel %vm294, %v984, 0
  %988 = vmatprep.subr.bf16.mxu0 0
  %989 = vmatpush1.bf16.msra.mxu0 0
  %990 = vmatprep.subr.bf16.mxu0 0
  %991 = vmatpush1.bf16.msra.mxu0 0
  %992 = vmatprep.subr.bf16.mxu0 0
  %993 = vmatpush1.bf16.msra.mxu0 0
  %994 = vmatprep.subr.bf16.mxu0 0
  %995 = vmatpush1.bf16.msra.mxu0 0
  %996 = vmatprep.subr.bf16.mxu0 0
  %997 = vmatpush1.bf16.msra.mxu0 0
  %998 = vmatprep.subr.bf16.mxu0 0
  %999 = vmatpush1.bf16.msra.mxu0 0
  %1000 = vmatprep.subr.bf16.mxu0 0
  %1001 = vmatpush1.bf16.msra.mxu0 0
  %1002 = vmatprep.subr.bf16.mxu0 0
  %1003 = vmatpush1.bf16.msra.mxu0 %v979
  %1004 = vmatprep.subr.bf16.mxu0 0
  %1005 = vmatpush2.bf16.msra.mxu0 0
  %1006 = vmatprep.subr.bf16.mxu0 0
  %1007 = vmatpush2.bf16.msra.mxu0 0
  %1008 = vmatprep.subr.bf16.mxu0 0
  %1009 = vmatpush2.bf16.msra.mxu0 0
  %1010 = vmatprep.subr.bf16.mxu0 0
  %1011 = vmatpush2.bf16.msra.mxu0 0
  %1012 = vmatprep.subr.bf16.mxu0 0
  %1013 = vmatpush2.bf16.msra.mxu0 0
  %1014 = vmatprep.subr.bf16.mxu0 0
  %1015 = vmatpush2.bf16.msra.mxu0 0
  %1016 = vmatprep.subr.bf16.mxu0 0
  %1017 = vmatpush2.bf16.msra.mxu0 0
  %1018 = vmatprep.subr.bf16.mxu0 0
  %1019 = vmatpush2.bf16.msra.mxu0 0
  %1020 = vmatprep.mubr.bf16.mxu0 0
  %1021 = vmatmul.mubr.bf16.gmra.mxu0 %v986
  %v1022 = vpop.f32.mrf.mxu0
  %v1023 = vadd.f32 0.0, %v1022
  %v1024 = vpop.f32.mrf.mxu0
  %v1025 = vpop.f32.mrf.mxu0
  %v1026 = vadd.f32 0.0, %v1025
  %v1027 = vpop.f32.mrf.mxu0
  %1028 = vdwg.mxu0
  %v1029 = vpack.c.bf16 %v1026, %v1023
  %v1038 = vunpack.c.l.b16 %v965
  %v1039 = vunpack.c.l.b16 %v966
  %v1040 = vunpack.c.l.b16 %v967
  %v1041 = vunpack.c.l.b16 %v968
  %v1042 = vunpack.c.l.b16 %v969
  %v1043 = vunpack.c.l.b16 %v970
  %v1044 = vunpack.c.l.b16 %v971
  %v1045 = vunpack.c.l.b16 %v972
  %v1046 = vpack.c.b16 %v1039, %v1038
  %v1047 = vpack.c.b16 %v1041, %v1040
  %v1048 = vpack.c.b16 %v1043, %v1042
  %v1049 = vpack.c.b16 %v1045, %v1044
  %v1055 = vsel %vm510, %v1029, 0
  %1057 = vmatprep.subr.bf16.mxu0 0
  %1058 = vmatpush1.bf16.msra.mxu0 0
  %1059 = vmatprep.subr.bf16.mxu0 0
  %1060 = vmatpush1.bf16.msra.mxu0 0
  %1061 = vmatprep.subr.bf16.mxu0 0
  %1062 = vmatpush1.bf16.msra.mxu0 0
  %1063 = vmatprep.subr.bf16.mxu0 0
  %1064 = vmatpush1.bf16.msra.mxu0 0
  %1065 = vmatprep.subr.bf16.mxu0 0
  %1066 = vmatpush1.bf16.msra.mxu0 %v1049
  %1067 = vmatprep.subr.bf16.mxu0 0
  %1068 = vmatpush1.bf16.msra.mxu0 %v1048
  %1069 = vmatprep.subr.bf16.mxu0 0
  %1070 = vmatpush1.bf16.msra.mxu0 %v1047
  %1071 = vmatprep.subr.bf16.mxu0 0
  %1072 = vmatpush1.bf16.msra.mxu0 %v1046
  %1073 = vmatprep.subr.bf16.mxu0 0
  %1074 = vmatpush2.bf16.msra.mxu0 0
  %1075 = vmatprep.subr.bf16.mxu0 0
  %1076 = vmatpush2.bf16.msra.mxu0 0
  %1077 = vmatprep.subr.bf16.mxu0 0
  %1078 = vmatpush2.bf16.msra.mxu0 0
  %1079 = vmatprep.subr.bf16.mxu0 0
  %1080 = vmatpush2.bf16.msra.mxu0 0
  %1081 = vmatprep.subr.bf16.mxu0 0
  %1082 = vmatpush2.bf16.msra.mxu0 0
  %1083 = vmatprep.subr.bf16.mxu0 0
  %1084 = vmatpush2.bf16.msra.mxu0 0
  %1085 = vmatprep.subr.bf16.mxu0 0
  %1086 = vmatpush2.bf16.msra.mxu0 0
  %1087 = vmatprep.subr.bf16.mxu0 0
  %1088 = vmatpush2.bf16.msra.mxu0 0
  %1089 = vmatprep.mubr.bf16.mxu0 0
  %1090 = vmatmul.mubr.bf16.gmra.mxu0 %v1055
  %v1091 = vpop.f32.mrf.mxu0
  %v1092 = vadd.f32 0.0, %v1091
  %v1093 = vpop.f32.mrf.mxu0
  %v1094 = vpop.f32.mrf.mxu0
  %v1095 = vadd.f32 0.0, %v1094
  %v1096 = vpop.f32.mrf.mxu0
  %1097 = vdwg.mxu0
  %v1098 = vmax.f32 %v1092, 0.0
  %v1099 = vmax.f32 %v1095, 0.0
  %v1100 = vpack.c.bf16 %v1099, %v1098
  %1101 = vmatprep.subr.bf16.mxu0 0
  %1102 = vmatpush1.bf16.msra.mxu0 0
  %1103 = vmatprep.subr.bf16.mxu0 0
  %1104 = vmatpush1.bf16.msra.mxu0 0
  %1105 = vmatprep.subr.bf16.mxu0 0
  %1106 = vmatpush1.bf16.msra.mxu0 0
  %1107 = vmatprep.subr.bf16.mxu0 0
  %1108 = vmatpush1.bf16.msra.mxu0 0
  %1109 = vmatprep.subr.bf16.mxu0 0
  %1110 = vmatpush1.bf16.msra.mxu0 0
  %1111 = vmatprep.subr.bf16.mxu0 0
  %1112 = vmatpush1.bf16.msra.mxu0 0
  %1113 = vmatprep.subr.bf16.mxu0 0
  %1114 = vmatpush1.bf16.msra.mxu0 0
  %1115 = vmatprep.subr.bf16.mxu0 0
  %1116 = vmatpush1.bf16.msra.mxu0 %v1100
  %1117 = vmatprep.subr.bf16.mxu0 0
  %1118 = vmatpush2.bf16.msra.mxu0 0
  %1119 = vmatprep.subr.bf16.mxu0 0
  %1120 = vmatpush2.bf16.msra.mxu0 0
  %1121 = vmatprep.subr.bf16.mxu0 0
  %1122 = vmatpush2.bf16.msra.mxu0 0
  %1123 = vmatprep.subr.bf16.mxu0 0
  %1124 = vmatpush2.bf16.msra.mxu0 0
  %1125 = vmatprep.subr.bf16.mxu0 0
  %1126 = vmatpush2.bf16.msra.mxu0 0
  %1127 = vmatprep.subr.bf16.mxu0 0
  %1128 = vmatpush2.bf16.msra.mxu0 0
  %1129 = vmatprep.subr.bf16.mxu0 0
  %1130 = vmatpush2.bf16.msra.mxu0 0
  %1131 = vmatprep.subr.bf16.mxu0 0
  %1132 = vmatpush2.bf16.msra.mxu0 0
  %1133 = vmatprep.mubr.bf16.mxu0 0
  %1134 = vmatmul.mubr.bf16.gmra.mxu0 %v986
  %v1135 = vpop.f32.mrf.mxu0
  %v1136 = vadd.f32 0.0, %v1135
  %v1137 = vpop.f32.mrf.mxu0
  %v1138 = vpop.f32.mrf.mxu0
  %v1139 = vadd.f32 0.0, %v1138
  %v1140 = vpop.f32.mrf.mxu0
  %1141 = vdwg.mxu0
  %v1142 = vpack.c.bf16 %v1139, %v1136
  %v1147 = vunpack.c.l.b16 %v973
  %v1148 = vunpack.c.l.b16 %v974
  %v1149 = vunpack.c.l.b16 %v975
  %v1150 = vunpack.c.l.b16 %v976
  %v1151 = vpack.c.b16 %v1148, %v1147
  %v1152 = vpack.c.b16 %v1150, %v1149
  %vm1155 = vcmask 261120
  %v1157 = vsel %vm1155, %v1142, 0
  %1159 = vmatprep.subr.bf16.mxu0 0
  %1160 = vmatpush1.bf16.msra.mxu0 0
  %1161 = vmatprep.subr.bf16.mxu0 0
  %1162 = vmatpush1.bf16.msra.mxu0 0
  %1163 = vmatprep.subr.bf16.mxu0 0
  %1164 = vmatpush1.bf16.msra.mxu0 0
  %1165 = vmatprep.subr.bf16.mxu0 0
  %1166 = vmatpush1.bf16.msra.mxu0 0
  %1167 = vmatprep.subr.bf16.mxu0 0
  %1168 = vmatpush1.bf16.msra.mxu0 0
  %1169 = vmatprep.subr.bf16.mxu0 0
  %1170 = vmatpush1.bf16.msra.mxu0 0
  %1171 = vmatprep.subr.bf16.mxu0 0
  %1172 = vmatpush1.bf16.msra.mxu0 %v1152
  %1173 = vmatprep.subr.bf16.mxu0 0
  %1174 = vmatpush1.bf16.msra.mxu0 %v1151
  %1175 = vmatprep.subr.bf16.mxu0 0
  %1176 = vmatpush2.bf16.msra.mxu0 0
  %1177 = vmatprep.subr.bf16.mxu0 0
  %1178 = vmatpush2.bf16.msra.mxu0 0
  %1179 = vmatprep.subr.bf16.mxu0 0
  %1180 = vmatpush2.bf16.msra.mxu0 0
  %1181 = vmatprep.subr.bf16.mxu0 0
  %1182 = vmatpush2.bf16.msra.mxu0 0
  %1183 = vmatprep.subr.bf16.mxu0 0
  %1184 = vmatpush2.bf16.msra.mxu0 0
  %1185 = vmatprep.subr.bf16.mxu0 0
  %1186 = vmatpush2.bf16.msra.mxu0 0
  %1187 = vmatprep.subr.bf16.mxu0 0
  %1188 = vmatpush2.bf16.msra.mxu0 0
  %1189 = vmatprep.subr.bf16.mxu0 0
  %1190 = vmatpush2.bf16.msra.mxu0 0
  %1191 = vmatprep.mubr.bf16.mxu0 0
  %1192 = vmatmul.mubr.bf16.gmra.mxu0 %v1157
  %v1193 = vpop.f32.mrf.mxu0
  %v1194 = vadd.f32 0.0, %v1193
  %v1195 = vpop.f32.mrf.mxu0
  %v1196 = vpop.f32.mrf.mxu0
  %v1197 = vadd.f32 0.0, %v1196
  %v1198 = vpop.f32.mrf.mxu0
  %1199 = vdwg.mxu0
  %1202 = vrot.lane.b32.xlu0 %v1194, 64
  %v1203 = vpop.permute.xlu0 %1202
  %1204 = vrot.lane.b32.xlu0 %v1197, 64
  %v1205 = vpop.permute.xlu0 %1204
  %v1208 = vsel %vm510, %v959, %v1203
  %v1209 = vsel %vm510, %v962, %v1205
  %v1210 = vld [vmem:[%s9] sm:$0xff]
  %v1211 = vld [vmem:[%s9 + $0x8] sm:$0xff]
  %v1212 = vmul.f32 %v1208, %v1210
  %v1213 = vmul.f32 %v1209, %v1210
  %1214 = vadd.xlane.f32.xlu0 %v1212
  %v1215 = vpop.xlane.xlu0 %1214
  %1216 = vadd.xlane.f32.xlu0 %v1213
  %v1217 = vpop.xlane.xlu0 %1216
  %v1218 = vadd.f32 %v1215, %v1211
  %v1219 = vadd.f32 %v1217, %v1211
  %v1220 = vxor.u32 %v1218, 2147483648
  %v1221 = vxor.u32 %v1219, 2147483648
  %v1222 = vmul.f32 %v1220, 1.442695
  %v1223 = vpow.pop %v1222
  %v1224 = vmul.f32 %v1221, 1.442695
  %v1225 = vpow.pop %v1224
  %v1226 = vadd.f32 %v1223, 1.0
  %v1227 = vadd.f32 %v1225, 1.0
  %v1228 = vrcp.pop %v1226
  %v1229 = vmul.f32 1.0, %v1228
  %v1230 = vrcp.pop %v1227
  %v1231 = vmul.f32 1.0, %v1230
  %vm1232 = vcmask 7168
  %1233 = vst.msk [vmem:[%s10] sm:$0xff] %vm1232, %v1229
  %1234 = vst.msk [vmem:[%s10 + $0x8] sm:$0xff] %vm1232, %v1231
  // Predicated region
  $region42: #{hmmbcr_forward.1} parent=0 // pred_check
    _
  $region43: #{hmmbcr_forward.1} parent=0 // pred_check_branch
    %1236 = sbr.rel (0) target = $region45
  $region44: #{hmmbcr_forward.1} parent=0 // pred_region
    _
  $region45: #{hmmbcr_forward.1} parent=0 // pred_fallthru
    _
  // Predicated region
  $region46: #{hmmbcr_forward.1} parent=0 // pred_check
    _
  $region47: #{hmmbcr_forward.1} parent=0 // pred_check_branch
    %1238 = sbr.rel (0) target = $region49
  $region48: #{hmmbcr_forward.1} parent=0 // pred_region
    _
  $region49: #{hmmbcr_forward.1} parent=0 // pred_fallthru
    _

</llo_original>
